<compile_context>
chip_gen: v6e
topology: v6e:2x2x1
jax: 0.10.0
libtpu: 0.0.40
codegen_flags: <defaults>
</compile_context>

<pallas_src>
import numpy as np
import jax
import jax.numpy as jnp
from jax.experimental import pallas as pl
from jax.experimental.pallas import tpu as pltpu


# ----------------------------------------------------------------------------
# Parameter construction (plain numpy glue, matches HiPPO_LegT.__init__)
# ----------------------------------------------------------------------------
def transition(N):
    Q = np.arange(N, dtype=np.float64)
    R = (2 * Q + 1)[:, None]
    j, i = np.meshgrid(Q, Q)
    A = np.where(i < j, -1, (-1.0) ** (i - j + 1)) * R
    B = (-1.0) ** Q[:, None] * R
    return (A, B)


def bilinear_discretize(A, B, dt):
    """signal.cont2discrete((A,B,C,D), dt, method='bilinear') for A, B only."""
    N = A.shape[0]
    I = np.eye(N, dtype=np.float64)
    M_left = I - (dt / 2.0) * A
    Ad = np.linalg.solve(M_left, I + (dt / 2.0) * A)
    Bd = np.linalg.solve(M_left, dt * B)
    return Ad, Bd


def make_hippo_legt_params(N, dt):
    A, B = transition(N)
    Ad, Bd = bilinear_discretize(A, B, dt)
    Bd = Bd.squeeze(-1)                       # (N,)
    return Ad.astype(np.float32), Bd.astype(np.float32)
    # TODO(synk): eval_matrix (scipy eval_legendre) is only used by .reconstruct(),
    # which is not part of forward(), so it is omitted here.


# ----------------------------------------------------------------------------
# Block-size selection helpers
# ----------------------------------------------------------------------------
def _pick_m_chunk(M, target=1024):
    """Largest lane-aligned (multiple of 128) chunk <= target dividing M, else M."""
    if M % 128 != 0:
        return M
    best = 128
    c = 128
    while c <= min(M, target):
        if M % c == 0:
            best = c
        c += 128
    return best


def _pick_t_block(L, max_block=32):
    """Timesteps per grid step: whole L if small, else a sublane-aligned divisor."""
    if L <= max_block:
        return L
    for tb in range(max_block, 7, -1):
        if L % tb == 0 and tb % 8 == 0:
            return tb
    return L  # fallback: process the whole sequence in one grid step


# ----------------------------------------------------------------------------
# Pallas kernel: time-blocked HiPPO recurrence, batch on lanes
# ----------------------------------------------------------------------------
def hippo_legt_kernel(x_ref, a_ref, b_ref, out_ref, c_ref):
    # x_ref   : (T_BLOCK, MC)   timestep rows for this (m-chunk, t-block)
    # a_ref   : (N, N)          A (not transposed; we compute A @ c)
    # b_ref   : (N, 1)          B as a column
    # out_ref : (T_BLOCK, N, MC)
    # c_ref   : (N, MC)         VMEM scratch carrying the recurrence state
    tb = pl.program_id(1)

    @pl.when(tb == 0)
    def _():
        c_ref[...] = jnp.zeros_like(c_ref)

    # Hoist loop-invariant loads / broadcasts out of the inner time loop.
    a = a_ref[...]            # (N, N)
    b = b_ref[...]            # (N, 1)
    c = c_ref[...]            # (N, MC)

    t_block = x_ref.shape[0]  # static
    for i in range(t_block):                     # short, fully unrolled
        f = x_ref[pl.ds(i, 1), :]                # (1, MC)  sublane row read
        c = jnp.dot(a, c, preferred_element_type=jnp.float32) + b * f
        out_ref[i, :, :] = c                     # lane-dense unmasked store

    c_ref[...] = c


def hippo_legt_forward(x, A, B):
    """x: (B1, B2, L) float32. Returns (L, B1, B2, N) float32."""
    B1, B2, L = x.shape
    N = A.shape[0]
    M = B1 * B2

    MC = _pick_m_chunk(M)      # batch chunk on lanes
    TB = _pick_t_block(L)      # timesteps per grid step
    n_m = M // MC
    n_t = L // TB

    # Layout: time on sublanes, flattened batch on lanes.
    x_t = jnp.transpose(x.reshape(M, L), (1, 0))          # (L, M)
    A_j = jnp.asarray(A, jnp.float32)                     # (N, N)
    B_col = jnp.asarray(B, jnp.float32).reshape(N, 1)     # (N, 1)

    out = pl.pallas_call(
        hippo_legt_kernel,
        out_shape=jax.ShapeDtypeStruct((L, N, M), jnp.float32),
        grid_spec=pltpu.PrefetchScalarGridSpec(
            num_scalar_prefetch=0,
            grid=(n_m, n_t),                               # (batch chunks, time blocks)
            in_specs=[
                pl.BlockSpec((TB, MC), lambda mc, tb: (tb, mc)),   # x slab
                pl.BlockSpec((N, N), lambda mc, tb: (0, 0)),       # A (constant)
                pl.BlockSpec((N, 1), lambda mc, tb: (0, 0)),       # B (constant)
            ],
            out_specs=pl.BlockSpec((TB, N, MC), lambda mc, tb: (tb, 0, mc)),
            scratch_shapes=[pltpu.VMEM((N, MC), jnp.float32)],     # recurrence state
        ),
        compiler_params=pltpu.CompilerParams(
            # batch chunks are independent (megacore-shardable on v7x);
            # the time axis carries the sequential recurrence -> arbitrary, innermost.
            dimension_semantics=("parallel", "arbitrary"),
        ),
    )(x_t, A_j, B_col)

    # (L, N, M) -> (L, M, N) -> (L, B1, B2, N)
    return jnp.transpose(out, (0, 2, 1)).reshape(L, B1, B2, N)


# ----------------------------------------------------------------------------
# Pure-JAX reference (mirrors the PyTorch forward loop) for verification
# ----------------------------------------------------------------------------
def hippo_legt_reference(x, A, B):
    B1, B2, L = x.shape
    A = jnp.asarray(A, jnp.float32)
    Bv = jnp.asarray(B, jnp.float32)
    N = A.shape[0]

    def step(c, f):
        new = f[..., None] * Bv[None, None, :]        # (B1, B2, N)
        c = jnp.einsum("abn,mn->abm", c, A) + new     # c @ A^T + new
        return c, c

    c0 = jnp.zeros((B1, B2, N), dtype=jnp.float32)
    xs = jnp.moveaxis(x, -1, 0)                       # (L, B1, B2)
    _, cs = jax.lax.scan(step, c0, xs)
    return cs                                         # (L, B1, B2, N)


if __name__ == "__main__":
    # Small shapes consistent with the module's forward (B1, B2, L) -> (L, B1, B2, N).
    # M = B1*B2 = 128 so the lane-dense (M on lanes) path is exercised.
    B1, B2, L, N = 8, 16, 16, 32
    dt = 1.0 / L

    A_np, B_np = make_hippo_legt_params(N, dt)

    key = jax.random.PRNGKey(0)
    x = jax.random.normal(key, (B1, B2, L), dtype=jnp.float32)

    out = hippo_legt_forward(x, A_np, B_np)
    out = jax.block_until_ready(out)

    ref = jax.block_until_ready(hippo_legt_reference(x, A_np, B_np))

    assert out.shape == (L, B1, B2, N), out.shape
    assert jnp.allclose(out, ref, atol=1e-3, rtol=1e-3), float(
        jnp.max(jnp.abs(out - ref))
    )

    print("KERNEL_OK")
</pallas_src>

<mosaic_0001>
module attributes {stable_mosaic.version = 11 : i64} {
  func.func @hippo_legt_kernel(%arg0: i32, %arg1: i32, %arg2: memref<16x128xf32, #tpu.memory_space<vmem>>, %arg3: memref<32x32xf32, #tpu.memory_space<vmem>>, %arg4: memref<32x1xf32, #tpu.memory_space<vmem>>, %arg5: memref<16x32x128xf32, #tpu.memory_space<vmem>>, %arg6: memref<32x128xf32, #tpu.memory_space<vmem>>) attributes {dimension_semantics = [#tpu.dimension_semantics<parallel>, #tpu.dimension_semantics<arbitrary>], iteration_bounds = array<i64: 1, 1>, scalar_prefetch = 0 : i64, scratch_operands = 1 : i64, tpu.core_type = #tpu.core_type<tc>, window_params = [{transform_indices = @transform_0, window_bounds = array<i64: 16, 128>}, {pipeline_mode = #tpu.pipeline_mode<synchronous>, transform_indices = @transform_1, window_bounds = array<i64: 32, 32>}, {pipeline_mode = #tpu.pipeline_mode<synchronous>, transform_indices = @transform_2, window_bounds = array<i64: 32, 1>}, {transform_indices = @transform_3, window_bounds = array<i64: 16, 32, 128>}]} {
    %c0_i32 = arith.constant 0 : i32
    %0 = arith.cmpi eq, %arg1, %c0_i32 : i32
    %1 = arith.extui %0 : i1 to i32
    %c0_i32_0 = arith.constant 0 : i32
    %2 = arith.cmpi ne, %1, %c0_i32_0 : i32
    scf.if %2 {
      %cst_88 = arith.constant 0.000000e+00 : f32
      %151 = vector.broadcast %cst_88 : f32 to vector<32x128xf32>
      %c0_89 = arith.constant 0 : index
      %c0_90 = arith.constant 0 : index
      %152 = vector.load %arg6[%c0_89, %c0_90] : memref<32x128xf32, #tpu.memory_space<vmem>>, vector<32x128xf32>
      tpu.vector_store %arg6[%c0_89, %c0_90], %151 {strides = array<i32>} : memref<32x128xf32, #tpu.memory_space<vmem>>, vector<32x128xf32>,
    } else {
    }
    %c0 = arith.constant 0 : index
    %c0_1 = arith.constant 0 : index
    %3 = vector.load %arg3[%c0, %c0_1] : memref<32x32xf32, #tpu.memory_space<vmem>>, vector<32x32xf32>
    %c0_2 = arith.constant 0 : index
    %c0_3 = arith.constant 0 : index
    %4 = vector.load %arg4[%c0_2, %c0_3] : memref<32x1xf32, #tpu.memory_space<vmem>>, vector<32x1xf32>
    %c0_4 = arith.constant 0 : index
    %c0_5 = arith.constant 0 : index
    %5 = vector.load %arg6[%c0_4, %c0_5] : memref<32x128xf32, #tpu.memory_space<vmem>>, vector<32x128xf32>
    %c0_6 = arith.constant 0 : index
    %c0_7 = arith.constant 0 : index
    %6 = vector.load %arg2[%c0_6, %c0_7] : memref<16x128xf32, #tpu.memory_space<vmem>>, vector<1x128xf32>
    %cst = arith.constant dense<0.000000e+00> : vector<32x128xf32>
    %7 = tpu.matmul %3, %5, %cst {dimension_numbers = #tpu.dot_dimension_numbers<[1], [0], [0], [1], [0, 0, 1, 1], [], []>} : vector<32x32xf32>, vector<32x128xf32>, vector<32x128xf32> -> vector<32x128xf32>
    %8 = vector.broadcast %4 : vector<32x1xf32> to vector<32x128xf32>
    %9 = vector.broadcast %6 : vector<1x128xf32> to vector<32x128xf32>
    %10 = arith.mulf %8, %9 : vector<32x128xf32>
    %11 = arith.addf %7, %10 : vector<32x128xf32>
    %c0_8 = arith.constant 0 : index
    %c0_9 = arith.constant 0 : index
    %c0_10 = arith.constant 0 : index
    %12 = vector.load %arg5[%c0_8, %c0_9, %c0_10] : memref<16x32x128xf32, #tpu.memory_space<vmem>>, vector<1x32x128xf32>
    %13 = vector.shape_cast %12 : vector<1x32x128xf32> to vector<32x128xf32>
    %14 = vector.shape_cast %11 : vector<32x128xf32> to vector<1x32x128xf32>
    tpu.vector_store %arg5[%c0_8, %c0_9, %c0_10], %14 {strides = array<i32>} : memref<16x32x128xf32, #tpu.memory_space<vmem>>, vector<1x32x128xf32>,
    %c1 = arith.constant 1 : index
    %c0_11 = arith.constant 0 : index
    %15 = vector.load %arg2[%c1, %c0_11] : memref<16x128xf32, #tpu.memory_space<vmem>>, vector<1x128xf32>
    %cst_12 = arith.constant dense<0.000000e+00> : vector<32x128xf32>
    %16 = tpu.matmul %3, %11, %cst_12 {dimension_numbers = #tpu.dot_dimension_numbers<[1], [0], [0], [1], [0, 0, 1, 1], [], []>} : vector<32x32xf32>, vector<32x128xf32>, vector<32x128xf32> -> vector<32x128xf32>
    %17 = vector.broadcast %4 : vector<32x1xf32> to vector<32x128xf32>
    %18 = vector.broadcast %15 : vector<1x128xf32> to vector<32x128xf32>
    %19 = arith.mulf %17, %18 : vector<32x128xf32>
    %20 = arith.addf %16, %19 : vector<32x128xf32>
    %c1_13 = arith.constant 1 : index
    %c0_14 = arith.constant 0 : index
    %c0_15 = arith.constant 0 : index
    %21 = vector.load %arg5[%c1_13, %c0_14, %c0_15] : memref<16x32x128xf32, #tpu.memory_space<vmem>>, vector<1x32x128xf32>
    %22 = vector.shape_cast %21 : vector<1x32x128xf32> to vector<32x128xf32>
    %23 = vector.shape_cast %20 : vector<32x128xf32> to vector<1x32x128xf32>
    tpu.vector_store %arg5[%c1_13, %c0_14, %c0_15], %23 {strides = array<i32>} : memref<16x32x128xf32, #tpu.memory_space<vmem>>, vector<1x32x128xf32>,
    %c2 = arith.constant 2 : index
    %c0_16 = arith.constant 0 : index
    %24 = vector.load %arg2[%c2, %c0_16] : memref<16x128xf32, #tpu.memory_space<vmem>>, vector<1x128xf32>
    %cst_17 = arith.constant dense<0.000000e+00> : vector<32x128xf32>
    %25 = tpu.matmul %3, %20, %cst_17 {dimension_numbers = #tpu.dot_dimension_numbers<[1], [0], [0], [1], [0, 0, 1, 1], [], []>} : vector<32x32xf32>, vector<32x128xf32>, vector<32x128xf32> -> vector<32x128xf32>
    %26 = vector.broadcast %4 : vector<32x1xf32> to vector<32x128xf32>
    %27 = vector.broadcast %24 : vector<1x128xf32> to vector<32x128xf32>
    %28 = arith.mulf %26, %27 : vector<32x128xf32>
    %29 = arith.addf %25, %28 : vector<32x128xf32>
    %c2_18 = arith.constant 2 : index
    %c0_19 = arith.constant 0 : index
    %c0_20 = arith.constant 0 : index
    %30 = vector.load %arg5[%c2_18, %c0_19, %c0_20] : memref<16x32x128xf32, #tpu.memory_space<vmem>>, vector<1x32x128xf32>
    %31 = vector.shape_cast %30 : vector<1x32x128xf32> to vector<32x128xf32>
    %32 = vector.shape_cast %29 : vector<32x128xf32> to vector<1x32x128xf32>
    tpu.vector_store %arg5[%c2_18, %c0_19, %c0_20], %32 {strides = array<i32>} : memref<16x32x128xf32, #tpu.memory_space<vmem>>, vector<1x32x128xf32>,
    %c3 = arith.constant 3 : index
    %c0_21 = arith.constant 0 : index
    %33 = vector.load %arg2[%c3, %c0_21] : memref<16x128xf32, #tpu.memory_space<vmem>>, vector<1x128xf32>
    %cst_22 = arith.constant dense<0.000000e+00> : vector<32x128xf32>
    %34 = tpu.matmul %3, %29, %cst_22 {dimension_numbers = #tpu.dot_dimension_numbers<[1], [0], [0], [1], [0, 0, 1, 1], [], []>} : vector<32x32xf32>, vector<32x128xf32>, vector<32x128xf32> -> vector<32x128xf32>
    %35 = vector.broadcast %4 : vector<32x1xf32> to vector<32x128xf32>
    %36 = vector.broadcast %33 : vector<1x128xf32> to vector<32x128xf32>
    %37 = arith.mulf %35, %36 : vector<32x128xf32>
    %38 = arith.addf %34, %37 : vector<32x128xf32>
    %c3_23 = arith.constant 3 : index
    %c0_24 = arith.constant 0 : index
    %c0_25 = arith.constant 0 : index
    %39 = vector.load %arg5[%c3_23, %c0_24, %c0_25] : memref<16x32x128xf32, #tpu.memory_space<vmem>>, vector<1x32x128xf32>
    %40 = vector.shape_cast %39 : vector<1x32x128xf32> to vector<32x128xf32>
    %41 = vector.shape_cast %38 : vector<32x128xf32> to vector<1x32x128xf32>
    tpu.vector_store %arg5[%c3_23, %c0_24, %c0_25], %41 {strides = array<i32>} : memref<16x32x128xf32, #tpu.memory_space<vmem>>, vector<1x32x128xf32>,
    %c4 = arith.constant 4 : index
    %c0_26 = arith.constant 0 : index
    %42 = vector.load %arg2[%c4, %c0_26] : memref<16x128xf32, #tpu.memory_space<vmem>>, vector<1x128xf32>
    %cst_27 = arith.constant dense<0.000000e+00> : vector<32x128xf32>
    %43 = tpu.matmul %3, %38, %cst_27 {dimension_numbers = #tpu.dot_dimension_numbers<[1], [0], [0], [1], [0, 0, 1, 1], [], []>} : vector<32x32xf32>, vector<32x128xf32>, vector<32x128xf32> -> vector<32x128xf32>
    %44 = vector.broadcast %4 : vector<32x1xf32> to vector<32x128xf32>
    %45 = vector.broadcast %42 : vector<1x128xf32> to vector<32x128xf32>
    %46 = arith.mulf %44, %45 : vector<32x128xf32>
    %47 = arith.addf %43, %46 : vector<32x128xf32>
    %c4_28 = arith.constant 4 : index
    %c0_29 = arith.constant 0 : index
    %c0_30 = arith.constant 0 : index
    %48 = vector.load %arg5[%c4_28, %c0_29, %c0_30] : memref<16x32x128xf32, #tpu.memory_space<vmem>>, vector<1x32x128xf32>
    %49 = vector.shape_cast %48 : vector<1x32x128xf32> to vector<32x128xf32>
    %50 = vector.shape_cast %47 : vector<32x128xf32> to vector<1x32x128xf32>
    tpu.vector_store %arg5[%c4_28, %c0_29, %c0_30], %50 {strides = array<i32>} : memref<16x32x128xf32, #tpu.memory_space<vmem>>, vector<1x32x128xf32>,
    %c5 = arith.constant 5 : index
    %c0_31 = arith.constant 0 : index
    %51 = vector.load %arg2[%c5, %c0_31] : memref<16x128xf32, #tpu.memory_space<vmem>>, vector<1x128xf32>
    %cst_32 = arith.constant dense<0.000000e+00> : vector<32x128xf32>
    %52 = tpu.matmul %3, %47, %cst_32 {dimension_numbers = #tpu.dot_dimension_numbers<[1], [0], [0], [1], [0, 0, 1, 1], [], []>} : vector<32x32xf32>, vector<32x128xf32>, vector<32x128xf32> -> vector<32x128xf32>
    %53 = vector.broadcast %4 : vector<32x1xf32> to vector<32x128xf32>
    %54 = vector.broadcast %51 : vector<1x128xf32> to vector<32x128xf32>
    %55 = arith.mulf %53, %54 : vector<32x128xf32>
    %56 = arith.addf %52, %55 : vector<32x128xf32>
    %c5_33 = arith.constant 5 : index
    %c0_34 = arith.constant 0 : index
    %c0_35 = arith.constant 0 : index
    %57 = vector.load %arg5[%c5_33, %c0_34, %c0_35] : memref<16x32x128xf32, #tpu.memory_space<vmem>>, vector<1x32x128xf32>
    %58 = vector.shape_cast %57 : vector<1x32x128xf32> to vector<32x128xf32>
    %59 = vector.shape_cast %56 : vector<32x128xf32> to vector<1x32x128xf32>
    tpu.vector_store %arg5[%c5_33, %c0_34, %c0_35], %59 {strides = array<i32>} : memref<16x32x128xf32, #tpu.memory_space<vmem>>, vector<1x32x128xf32>,
    %c6 = arith.constant 6 : index
    %c0_36 = arith.constant 0 : index
    %60 = vector.load %arg2[%c6, %c0_36] : memref<16x128xf32, #tpu.memory_space<vmem>>, vector<1x128xf32>
    %cst_37 = arith.constant dense<0.000000e+00> : vector<32x128xf32>
    %61 = tpu.matmul %3, %56, %cst_37 {dimension_numbers = #tpu.dot_dimension_numbers<[1], [0], [0], [1], [0, 0, 1, 1], [], []>} : vector<32x32xf32>, vector<32x128xf32>, vector<32x128xf32> -> vector<32x128xf32>
    %62 = vector.broadcast %4 : vector<32x1xf32> to vector<32x128xf32>
    %63 = vector.broadcast %60 : vector<1x128xf32> to vector<32x128xf32>
    %64 = arith.mulf %62, %63 : vector<32x128xf32>
    %65 = arith.addf %61, %64 : vector<32x128xf32>
    %c6_38 = arith.constant 6 : index
    %c0_39 = arith.constant 0 : index
    %c0_40 = arith.constant 0 : index
    %66 = vector.load %arg5[%c6_38, %c0_39, %c0_40] : memref<16x32x128xf32, #tpu.memory_space<vmem>>, vector<1x32x128xf32>
    %67 = vector.shape_cast %66 : vector<1x32x128xf32> to vector<32x128xf32>
    %68 = vector.shape_cast %65 : vector<32x128xf32> to vector<1x32x128xf32>
    tpu.vector_store %arg5[%c6_38, %c0_39, %c0_40], %68 {strides = array<i32>} : memref<16x32x128xf32, #tpu.memory_space<vmem>>, vector<1x32x128xf32>,
    %c7 = arith.constant 7 : index
    %c0_41 = arith.constant 0 : index
    %69 = vector.load %arg2[%c7, %c0_41] : memref<16x128xf32, #tpu.memory_space<vmem>>, vector<1x128xf32>
    %cst_42 = arith.constant dense<0.000000e+00> : vector<32x128xf32>
    %70 = tpu.matmul %3, %65, %cst_42 {dimension_numbers = #tpu.dot_dimension_numbers<[1], [0], [0], [1], [0, 0, 1, 1], [], []>} : vector<32x32xf32>, vector<32x128xf32>, vector<32x128xf32> -> vector<32x128xf32>
    %71 = vector.broadcast %4 : vector<32x1xf32> to vector<32x128xf32>
    %72 = vector.broadcast %69 : vector<1x128xf32> to vector<32x128xf32>
    %73 = arith.mulf %71, %72 : vector<32x128xf32>
    %74 = arith.addf %70, %73 : vector<32x128xf32>
    %c7_43 = arith.constant 7 : index
    %c0_44 = arith.constant 0 : index
    %c0_45 = arith.constant 0 : index
    %75 = vector.load %arg5[%c7_43, %c0_44, %c0_45] : memref<16x32x128xf32, #tpu.memory_space<vmem>>, vector<1x32x128xf32>
    %76 = vector.shape_cast %75 : vector<1x32x128xf32> to vector<32x128xf32>
    %77 = vector.shape_cast %74 : vector<32x128xf32> to vector<1x32x128xf32>
    tpu.vector_store %arg5[%c7_43, %c0_44, %c0_45], %77 {strides = array<i32>} : memref<16x32x128xf32, #tpu.memory_space<vmem>>, vector<1x32x128xf32>,
    %c8 = arith.constant 8 : index
    %c0_46 = arith.constant 0 : index
    %78 = vector.load %arg2[%c8, %c0_46] : memref<16x128xf32, #tpu.memory_space<vmem>>, vector<1x128xf32>
    %cst_47 = arith.constant dense<0.000000e+00> : vector<32x128xf32>
    %79 = tpu.matmul %3, %74, %cst_47 {dimension_numbers = #tpu.dot_dimension_numbers<[1], [0], [0], [1], [0, 0, 1, 1], [], []>} : vector<32x32xf32>, vector<32x128xf32>, vector<32x128xf32> -> vector<32x128xf32>
    %80 = vector.broadcast %4 : vector<32x1xf32> to vector<32x128xf32>
    %81 = vector.broadcast %78 : vector<1x128xf32> to vector<32x128xf32>
    %82 = arith.mulf %80, %81 : vector<32x128xf32>
    %83 = arith.addf %79, %82 : vector<32x128xf32>
    %c8_48 = arith.constant 8 : index
    %c0_49 = arith.constant 0 : index
    %c0_50 = arith.constant 0 : index
    %84 = vector.load %arg5[%c8_48, %c0_49, %c0_50] : memref<16x32x128xf32, #tpu.memory_space<vmem>>, vector<1x32x128xf32>
    %85 = vector.shape_cast %84 : vector<1x32x128xf32> to vector<32x128xf32>
    %86 = vector.shape_cast %83 : vector<32x128xf32> to vector<1x32x128xf32>
    tpu.vector_store %arg5[%c8_48, %c0_49, %c0_50], %86 {strides = array<i32>} : memref<16x32x128xf32, #tpu.memory_space<vmem>>, vector<1x32x128xf32>,
    %c9 = arith.constant 9 : index
    %c0_51 = arith.constant 0 : index
    %87 = vector.load %arg2[%c9, %c0_51] : memref<16x128xf32, #tpu.memory_space<vmem>>, vector<1x128xf32>
    %cst_52 = arith.constant dense<0.000000e+00> : vector<32x128xf32>
    %88 = tpu.matmul %3, %83, %cst_52 {dimension_numbers = #tpu.dot_dimension_numbers<[1], [0], [0], [1], [0, 0, 1, 1], [], []>} : vector<32x32xf32>, vector<32x128xf32>, vector<32x128xf32> -> vector<32x128xf32>
    %89 = vector.broadcast %4 : vector<32x1xf32> to vector<32x128xf32>
    %90 = vector.broadcast %87 : vector<1x128xf32> to vector<32x128xf32>
    %91 = arith.mulf %89, %90 : vector<32x128xf32>
    %92 = arith.addf %88, %91 : vector<32x128xf32>
    %c9_53 = arith.constant 9 : index
    %c0_54 = arith.constant 0 : index
    %c0_55 = arith.constant 0 : index
    %93 = vector.load %arg5[%c9_53, %c0_54, %c0_55] : memref<16x32x128xf32, #tpu.memory_space<vmem>>, vector<1x32x128xf32>
    %94 = vector.shape_cast %93 : vector<1x32x128xf32> to vector<32x128xf32>
    %95 = vector.shape_cast %92 : vector<32x128xf32> to vector<1x32x128xf32>
    tpu.vector_store %arg5[%c9_53, %c0_54, %c0_55], %95 {strides = array<i32>} : memref<16x32x128xf32, #tpu.memory_space<vmem>>, vector<1x32x128xf32>,
    %c10 = arith.constant 10 : index
    %c0_56 = arith.constant 0 : index
    %96 = vector.load %arg2[%c10, %c0_56] : memref<16x128xf32, #tpu.memory_space<vmem>>, vector<1x128xf32>
    %cst_57 = arith.constant dense<0.000000e+00> : vector<32x128xf32>
    %97 = tpu.matmul %3, %92, %cst_57 {dimension_numbers = #tpu.dot_dimension_numbers<[1], [0], [0], [1], [0, 0, 1, 1], [], []>} : vector<32x32xf32>, vector<32x128xf32>, vector<32x128xf32> -> vector<32x128xf32>
    %98 = vector.broadcast %4 : vector<32x1xf32> to vector<32x128xf32>
    %99 = vector.broadcast %96 : vector<1x128xf32> to vector<32x128xf32>
    %100 = arith.mulf %98, %99 : vector<32x128xf32>
    %101 = arith.addf %97, %100 : vector<32x128xf32>
    %c10_58 = arith.constant 10 : index
    %c0_59 = arith.constant 0 : index
    %c0_60 = arith.constant 0 : index
    %102 = vector.load %arg5[%c10_58, %c0_59, %c0_60] : memref<16x32x128xf32, #tpu.memory_space<vmem>>, vector<1x32x128xf32>
    %103 = vector.shape_cast %102 : vector<1x32x128xf32> to vector<32x128xf32>
    %104 = vector.shape_cast %101 : vector<32x128xf32> to vector<1x32x128xf32>
    tpu.vector_store %arg5[%c10_58, %c0_59, %c0_60], %104 {strides = array<i32>} : memref<16x32x128xf32, #tpu.memory_space<vmem>>, vector<1x32x128xf32>,
    %c11 = arith.constant 11 : index
    %c0_61 = arith.constant 0 : index
    %105 = vector.load %arg2[%c11, %c0_61] : memref<16x128xf32, #tpu.memory_space<vmem>>, vector<1x128xf32>
    %cst_62 = arith.constant dense<0.000000e+00> : vector<32x128xf32>
    %106 = tpu.matmul %3, %101, %cst_62 {dimension_numbers = #tpu.dot_dimension_numbers<[1], [0], [0], [1], [0, 0, 1, 1], [], []>} : vector<32x32xf32>, vector<32x128xf32>, vector<32x128xf32> -> vector<32x128xf32>
    %107 = vector.broadcast %4 : vector<32x1xf32> to vector<32x128xf32>
    %108 = vector.broadcast %105 : vector<1x128xf32> to vector<32x128xf32>
    %109 = arith.mulf %107, %108 : vector<32x128xf32>
    %110 = arith.addf %106, %109 : vector<32x128xf32>
    %c11_63 = arith.constant 11 : index
    %c0_64 = arith.constant 0 : index
    %c0_65 = arith.constant 0 : index
    %111 = vector.load %arg5[%c11_63, %c0_64, %c0_65] : memref<16x32x128xf32, #tpu.memory_space<vmem>>, vector<1x32x128xf32>
    %112 = vector.shape_cast %111 : vector<1x32x128xf32> to vector<32x128xf32>
    %113 = vector.shape_cast %110 : vector<32x128xf32> to vector<1x32x128xf32>
    tpu.vector_store %arg5[%c11_63, %c0_64, %c0_65], %113 {strides = array<i32>} : memref<16x32x128xf32, #tpu.memory_space<vmem>>, vector<1x32x128xf32>,
    %c12 = arith.constant 12 : index
    %c0_66 = arith.constant 0 : index
    %114 = vector.load %arg2[%c12, %c0_66] : memref<16x128xf32, #tpu.memory_space<vmem>>, vector<1x128xf32>
    %cst_67 = arith.constant dense<0.000000e+00> : vector<32x128xf32>
    %115 = tpu.matmul %3, %110, %cst_67 {dimension_numbers = #tpu.dot_dimension_numbers<[1], [0], [0], [1], [0, 0, 1, 1], [], []>} : vector<32x32xf32>, vector<32x128xf32>, vector<32x128xf32> -> vector<32x128xf32>
    %116 = vector.broadcast %4 : vector<32x1xf32> to vector<32x128xf32>
    %117 = vector.broadcast %114 : vector<1x128xf32> to vector<32x128xf32>
    %118 = arith.mulf %116, %117 : vector<32x128xf32>
    %119 = arith.addf %115, %118 : vector<32x128xf32>
    %c12_68 = arith.constant 12 : index
    %c0_69 = arith.constant 0 : index
    %c0_70 = arith.constant 0 : index
    %120 = vector.load %arg5[%c12_68, %c0_69, %c0_70] : memref<16x32x128xf32, #tpu.memory_space<vmem>>, vector<1x32x128xf32>
    %121 = vector.shape_cast %120 : vector<1x32x128xf32> to vector<32x128xf32>
    %122 = vector.shape_cast %119 : vector<32x128xf32> to vector<1x32x128xf32>
    tpu.vector_store %arg5[%c12_68, %c0_69, %c0_70], %122 {strides = array<i32>} : memref<16x32x128xf32, #tpu.memory_space<vmem>>, vector<1x32x128xf32>,
    %c13 = arith.constant 13 : index
    %c0_71 = arith.constant 0 : index
    %123 = vector.load %arg2[%c13, %c0_71] : memref<16x128xf32, #tpu.memory_space<vmem>>, vector<1x128xf32>
    %cst_72 = arith.constant dense<0.000000e+00> : vector<32x128xf32>
    %124 = tpu.matmul %3, %119, %cst_72 {dimension_numbers = #tpu.dot_dimension_numbers<[1], [0], [0], [1], [0, 0, 1, 1], [], []>} : vector<32x32xf32>, vector<32x128xf32>, vector<32x128xf32> -> vector<32x128xf32>
    %125 = vector.broadcast %4 : vector<32x1xf32> to vector<32x128xf32>
    %126 = vector.broadcast %123 : vector<1x128xf32> to vector<32x128xf32>
    %127 = arith.mulf %125, %126 : vector<32x128xf32>
    %128 = arith.addf %124, %127 : vector<32x128xf32>
    %c13_73 = arith.constant 13 : index
    %c0_74 = arith.constant 0 : index
    %c0_75 = arith.constant 0 : index
    %129 = vector.load %arg5[%c13_73, %c0_74, %c0_75] : memref<16x32x128xf32, #tpu.memory_space<vmem>>, vector<1x32x128xf32>
    %130 = vector.shape_cast %129 : vector<1x32x128xf32> to vector<32x128xf32>
    %131 = vector.shape_cast %128 : vector<32x128xf32> to vector<1x32x128xf32>
    tpu.vector_store %arg5[%c13_73, %c0_74, %c0_75], %131 {strides = array<i32>} : memref<16x32x128xf32, #tpu.memory_space<vmem>>, vector<1x32x128xf32>,
    %c14 = arith.constant 14 : index
    %c0_76 = arith.constant 0 : index
    %132 = vector.load %arg2[%c14, %c0_76] : memref<16x128xf32, #tpu.memory_space<vmem>>, vector<1x128xf32>
    %cst_77 = arith.constant dense<0.000000e+00> : vector<32x128xf32>
    %133 = tpu.matmul %3, %128, %cst_77 {dimension_numbers = #tpu.dot_dimension_numbers<[1], [0], [0], [1], [0, 0, 1, 1], [], []>} : vector<32x32xf32>, vector<32x128xf32>, vector<32x128xf32> -> vector<32x128xf32>
    %134 = vector.broadcast %4 : vector<32x1xf32> to vector<32x128xf32>
    %135 = vector.broadcast %132 : vector<1x128xf32> to vector<32x128xf32>
    %136 = arith.mulf %134, %135 : vector<32x128xf32>
    %137 = arith.addf %133, %136 : vector<32x128xf32>
    %c14_78 = arith.constant 14 : index
    %c0_79 = arith.constant 0 : index
    %c0_80 = arith.constant 0 : index
    %138 = vector.load %arg5[%c14_78, %c0_79, %c0_80] : memref<16x32x128xf32, #tpu.memory_space<vmem>>, vector<1x32x128xf32>
    %139 = vector.shape_cast %138 : vector<1x32x128xf32> to vector<32x128xf32>
    %140 = vector.shape_cast %137 : vector<32x128xf32> to vector<1x32x128xf32>
    tpu.vector_store %arg5[%c14_78, %c0_79, %c0_80], %140 {strides = array<i32>} : memref<16x32x128xf32, #tpu.memory_space<vmem>>, vector<1x32x128xf32>,
    %c15 = arith.constant 15 : index
    %c0_81 = arith.constant 0 : index
    %141 = vector.load %arg2[%c15, %c0_81] : memref<16x128xf32, #tpu.memory_space<vmem>>, vector<1x128xf32>
    %cst_82 = arith.constant dense<0.000000e+00> : vector<32x128xf32>
    %142 = tpu.matmul %3, %137, %cst_82 {dimension_numbers = #tpu.dot_dimension_numbers<[1], [0], [0], [1], [0, 0, 1, 1], [], []>} : vector<32x32xf32>, vector<32x128xf32>, vector<32x128xf32> -> vector<32x128xf32>
    %143 = vector.broadcast %4 : vector<32x1xf32> to vector<32x128xf32>
    %144 = vector.broadcast %141 : vector<1x128xf32> to vector<32x128xf32>
    %145 = arith.mulf %143, %144 : vector<32x128xf32>
    %146 = arith.addf %142, %145 : vector<32x128xf32>
    %c15_83 = arith.constant 15 : index
    %c0_84 = arith.constant 0 : index
    %c0_85 = arith.constant 0 : index
    %147 = vector.load %arg5[%c15_83, %c0_84, %c0_85] : memref<16x32x128xf32, #tpu.memory_space<vmem>>, vector<1x32x128xf32>
    %148 = vector.shape_cast %147 : vector<1x32x128xf32> to vector<32x128xf32>
    %149 = vector.shape_cast %146 : vector<32x128xf32> to vector<1x32x128xf32>
    tpu.vector_store %arg5[%c15_83, %c0_84, %c0_85], %149 {strides = array<i32>} : memref<16x32x128xf32, #tpu.memory_space<vmem>>, vector<1x32x128xf32>,
    %c0_86 = arith.constant 0 : index
    %c0_87 = arith.constant 0 : index
    %150 = vector.load %arg6[%c0_86, %c0_87] : memref<32x128xf32, #tpu.memory_space<vmem>>, vector<32x128xf32>
    tpu.vector_store %arg6[%c0_86, %c0_87], %146 {strides = array<i32>} : memref<32x128xf32, #tpu.memory_space<vmem>>, vector<32x128xf32>,
    return
  }
  func.func @transform_0(%arg0: i32, %arg1: i32) -> (i32, i32) {
    %c0_i32 = arith.constant 0 : i32
    return %arg1, %arg0 : i32, i32
  }
  func.func @transform_1(%arg0: i32, %arg1: i32) -> (i32, i32) {
    %c0_i32 = arith.constant 0 : i32
    %c0_i32_0 = arith.constant 0 : i32
    %c0_i32_1 = arith.constant 0 : i32
    return %c0_i32, %c0_i32_0 : i32, i32
  }
  func.func @transform_2(%arg0: i32, %arg1: i32) -> (i32, i32) {
    %c0_i32 = arith.constant 0 : i32
    %c0_i32_0 = arith.constant 0 : i32
    %c0_i32_1 = arith.constant 0 : i32
    return %c0_i32, %c0_i32_0 : i32, i32
  }
  func.func @transform_3(%arg0: i32, %arg1: i32) -> (i32, i32, i32) {
    %c0_i32 = arith.constant 0 : i32
    %c0_i32_0 = arith.constant 0 : i32
    return %arg1, %c0_i32, %arg0 : i32, i32, i32
  }
}

</mosaic_0001>

<llo_original>
// kernel: tpu_custom_call.1
$region0: #{tpu_custom_call.1}
  #allocation0 [shape = 'u32[]', space=smem, size = 0x4, offset = 0x4, fixed_abs, tag = 'smem constant byte address 0x4 - core index']
  #allocation1 [shape = 'u32[144,128]{1,0:T(1,128)}', space=vmem, size = 0x12000, scoped, tag = 'internal scratch']
  #allocation2 [shape = 'f32[32,128]{1,0:T(8,128)}', space=vmem, size = 0x4000, scoped, tag = 'scratch operand']
  %s0 = inlined_call_operand.hbm [shape: f32[16,128], index: 0, kind: input, shape index: {}]
  %s1 = inlined_call_operand.vmem [shape: f32[32,32], index: 1, kind: input, shape index: {}]
  %s2 = inlined_call_operand.vmem [shape: f32[32,1], index: 2, kind: input, shape index: {}]
  %s3 = inlined_call_operand.hbm [shape: f32[16,32,128], index: 3, kind: output, shape index: {}]
  %s4 = sld [smem:[#allocation0]]
  $region30: #{tpu_custom_call.1} parent=0
    _
  %s6 = ssub.s32 1, %s4
  %s7 = scalar_select 0, %s6, %s4
  $region1: #{tpu_custom_call.1} parent=0
    #allocation3 [shape = 'u8[8192]{0}', space=vmem, size = 0x2000, scoped, tag = 'input window, operand 0, single buffered']
    #allocation4 [shape = 's32[1]{0}', space=sflag, size = 0x4, scoped, tag = 'scoped memory for tpu_custom_call.1']
    #allocation5 [shape = 's32[1]{0}', space=sflag, size = 0x4, scoped, tag = 'scoped memory for tpu_custom_call.1']
    #allocation6 [shape = 'u8[262144]{0}', space=vmem, size = 0x40000, scoped, tag = 'output window, operand 0, single buffered']
    %8 = vsyncpa [#allocation4], 0
    %9 = vsyncpa [#allocation5], 0
    // Predicated region
    $region2: #{tpu_custom_call.1} parent=1 // pred_check
      _
    $region3: #{tpu_custom_call.1} parent=1 // pred_check_branch
      %11 = sbr.rel (0) target = $region5
    $region4: #{tpu_custom_call.1} parent=1 // pred_region
      %s13 = ssub.s32 256, 256
      %14 = vsyncadd [#allocation4], %s13
      %s15 = sshll.u32 [#allocation3], 4
      %s16 = int_to_ptr.vmem [resolvable:$true] %s15
      %21 = dma.hbm_to_vmem [thread:$0]  %s0, 256, %s16, [#allocation4], 128, 128, 8
    $region5: #{tpu_custom_call.1} parent=1 // pred_fallthru
      _
    // Predicated region
    $region6: #{tpu_custom_call.1} parent=1 // pred_check
      _
    $region7: #{tpu_custom_call.1} parent=1 // pred_check_branch
      %23 = sbr.rel (0) target = $region9
    $region8: #{tpu_custom_call.1} parent=1 // pred_region
      _
    $region9: #{tpu_custom_call.1} parent=1 // pred_fallthru
      _
    // Predicated region
    $region10: #{tpu_custom_call.1} parent=1 // pred_check
      _
    $region11: #{tpu_custom_call.1} parent=1 // pred_check_branch
      %25 = sbr.rel (0) target = $region13
    $region12: #{tpu_custom_call.1} parent=1 // pred_region
      _
    $region13: #{tpu_custom_call.1} parent=1 // pred_fallthru
      _
    // Predicated region
    $region14: #{tpu_custom_call.1} parent=1 // pred_check
      _
    $region15: #{tpu_custom_call.1} parent=1 // pred_check_branch
      %27 = sbr.rel (0) target = $region17
    $region16: #{tpu_custom_call.1} parent=1 // pred_region
      %28 = dma.done [#allocation4], 256
    $region17: #{tpu_custom_call.1} parent=1 // pred_fallthru
      _
    %p29 = scmp.eq.s32.totalorder 0, 0
    // Predicated region
    $region18: #{tpu_custom_call.1} parent=1 // pred_check
      %p30 = pneg %p29
    $region19: #{tpu_custom_call.1} parent=1 // pred_check_branch
      %32 = sbr.rel (%p30) target = $region21
    $region20: #{tpu_custom_call.1} parent=1 // pred_region
      %33 = vst [vmem:[#allocation2] sm:$0xff] 0.0
      %34 = vst [vmem:[#allocation2 + $0x8] sm:$0xff] 0.0
      %35 = vst [vmem:[#allocation2 + $0x10] sm:$0xff] 0.0
      %36 = vst [vmem:[#allocation2 + $0x18] sm:$0xff] 0.0
    $region21: #{tpu_custom_call.1} parent=1 // pred_fallthru
      _
    %v37 = vld [vmem:[%s1] sm:$0xff]
    %v38 = vld [vmem:[%s1 + $0x8] sm:$0xff]
    %v39 = vld [vmem:[%s1 + $0x10] sm:$0xff]
    %v40 = vld [vmem:[%s1 + $0x18] sm:$0xff]
    %v41 = vld [vmem:[%s2] sm:$0xff]
    %v42 = vld [vmem:[%s2 + $0x8] sm:$0xff]
    %v43 = vld [vmem:[%s2 + $0x10] sm:$0xff]
    %v44 = vld [vmem:[%s2 + $0x18] sm:$0xff]
    %v45 = vld [vmem:[#allocation2] sm:$0xff]
    %v46 = vld [vmem:[#allocation2 + $0x8] sm:$0xff]
    %v47 = vld [vmem:[#allocation2 + $0x10] sm:$0xff]
    %v48 = vld [vmem:[#allocation2 + $0x18] sm:$0xff]
    %v49 = vld [vmem:[#allocation3] sm:$0x1]
    %51 = vset.pattern.permute.xlu0 0
    %52 = vperm.xlu0 %51, %v41
    %v53 = vpop.permute.xlu0 %52
    %56 = vset.pattern.permute.xlu0 0
    %57 = vperm.xlu0 %56, %v42
    %v58 = vpop.permute.xlu0 %57
    %61 = vset.pattern.permute.xlu0 0
    %62 = vperm.xlu0 %61, %v43
    %v63 = vpop.permute.xlu0 %62
    %66 = vset.pattern.permute.xlu0 0
    %67 = vperm.xlu0 %66, %v44
    %v68 = vpop.permute.xlu0 %67
    %v70 = vlaneseq
    %v71 = vshrl.u32 %v70, 7
    %v72 = vsub.s32 0, %v71
    %v73 = vrot.slane %v49, %v72
    %v74 = vmul.f32 %v53, %v73
    %v75 = vmul.f32 %v58, %v73
    %v76 = vmul.f32 %v63, %v73
    %v77 = vmul.f32 %v68, %v73
    %vm78 = vcmask 261120
    %v80 = vsel %vm78, %v37, 0
    %v83 = vsel %vm78, %v38, 0
    %v86 = vsel %vm78, %v39, 0
    %v89 = vsel %vm78, %v40, 0
    %91 = vmatprep.subr.mxu0 0.0
    %92 = vmatpush1.msra.mxu0 0.0
    %93 = vmatprep.subr.mxu0 0.0
    %94 = vmatpush1.msra.mxu0 0.0
    %95 = vmatprep.subr.mxu0 0.0
    %96 = vmatpush1.msra.mxu0 0.0
    %97 = vmatprep.subr.mxu0 0.0
    %98 = vmatpush1.msra.mxu0 0.0
    %99 = vmatprep.subr.mxu0 0.0
    %100 = vmatpush1.msra.mxu0 0.0
    %101 = vmatprep.subr.mxu0 0.0
    %102 = vmatpush1.msra.mxu0 0.0
    %103 = vmatprep.subr.mxu0 0.0
    %104 = vmatpush1.msra.mxu0 0.0
    %105 = vmatprep.subr.mxu0 0.0
    %106 = vmatpush1.msra.mxu0 0.0
    %107 = vmatprep.subr.mxu0 0.0
    %108 = vmatpush1.msra.mxu0 0.0
    %109 = vmatprep.subr.mxu0 0.0
    %110 = vmatpush1.msra.mxu0 0.0
    %111 = vmatprep.subr.mxu0 0.0
    %112 = vmatpush1.msra.mxu0 0.0
    %113 = vmatprep.subr.mxu0 0.0
    %114 = vmatpush1.msra.mxu0 0.0
    %115 = vmatprep.subr.mxu0 0.0
    %116 = vmatpush1.msra.mxu0 %v48
    %117 = vmatprep.subr.mxu0 0.0
    %118 = vmatpush1.msra.mxu0 %v47
    %119 = vmatprep.subr.mxu0 0.0
    %120 = vmatpush1.msra.mxu0 %v46
    %121 = vmatprep.subr.mxu0 0.0
    %122 = vmatpush1.msra.mxu0 %v45
    %123 = vmatprep.subr.mxu0 0.0
    %124 = vmatpush2.msra.mxu0 0.0
    %125 = vmatprep.subr.mxu0 0.0
    %126 = vmatpush2.msra.mxu0 0.0
    %127 = vmatprep.subr.mxu0 0.0
    %128 = vmatpush2.msra.mxu0 0.0
    %129 = vmatprep.subr.mxu0 0.0
    %130 = vmatpush2.msra.mxu0 0.0
    %131 = vmatprep.subr.mxu0 0.0
    %132 = vmatpush2.msra.mxu0 0.0
    %133 = vmatprep.subr.mxu0 0.0
    %134 = vmatpush2.msra.mxu0 0.0
    %135 = vmatprep.subr.mxu0 0.0
    %136 = vmatpush2.msra.mxu0 0.0
    %137 = vmatprep.subr.mxu0 0.0
    %138 = vmatpush2.msra.mxu0 0.0
    %139 = vmatprep.subr.mxu0 0.0
    %140 = vmatpush2.msra.mxu0 0.0
    %141 = vmatprep.subr.mxu0 0.0
    %142 = vmatpush2.msra.mxu0 0.0
    %143 = vmatprep.subr.mxu0 0.0
    %144 = vmatpush2.msra.mxu0 0.0
    %145 = vmatprep.subr.mxu0 0.0
    %146 = vmatpush2.msra.mxu0 0.0
    %147 = vmatprep.subr.mxu0 0.0
    %148 = vmatpush2.msra.mxu0 0.0
    %149 = vmatprep.subr.mxu0 0.0
    %150 = vmatpush2.msra.mxu0 0.0
    %151 = vmatprep.subr.mxu0 0.0
    %152 = vmatpush2.msra.mxu0 0.0
    %153 = vmatprep.subr.mxu0 0.0
    %154 = vmatpush2.msra.mxu0 0.0
    %155 = vmatprep.mubr.f32.mxu0 0.0
    %156 = vmatmul.mubr.f32.gmra.mxu0 %v80
    %v157 = vpop.f32.mrf.mxu0
    %v158 = vadd.f32 %v74, %v157
    %v159 = vpop.f32.mrf.mxu0
    %160 = vmatprep.mubr.f32.mxu0 0.0
    %161 = vmatmul.mubr.f32.gmra.mxu0 %v83
    %v162 = vpop.f32.mrf.mxu0
    %v163 = vadd.f32 %v75, %v162
    %v164 = vpop.f32.mrf.mxu0
    %165 = vmatprep.mubr.f32.mxu0 0.0
    %166 = vmatmul.mubr.f32.gmra.mxu0 %v86
    %v167 = vpop.f32.mrf.mxu0
    %v168 = vadd.f32 %v76, %v167
    %v169 = vpop.f32.mrf.mxu0
    %170 = vmatprep.mubr.f32.mxu0 0.0
    %171 = vmatmul.mubr.f32.gmra.mxu0 %v89
    %v172 = vpop.f32.mrf.mxu0
    %v173 = vadd.f32 %v77, %v172
    %v174 = vpop.f32.mrf.mxu0
    %175 = vdwg.mxu0
    %176 = vst [vmem:[#allocation6] sm:$0xff] %v158
    %177 = vst [vmem:[#allocation6 + $0x8] sm:$0xff] %v163
    %178 = vst [vmem:[#allocation6 + $0x10] sm:$0xff] %v168
    %179 = vst [vmem:[#allocation6 + $0x18] sm:$0xff] %v173
    %v180 = vld [vmem:[#allocation3 + $0x1] sm:$0x1]
    %v181 = vlaneseq
    %v182 = vshrl.u32 %v181, 7
    %v183 = vsub.s32 0, %v182
    %v184 = vrot.slane %v180, %v183
    %v185 = vmul.f32 %v53, %v184
    %v186 = vmul.f32 %v58, %v184
    %v187 = vmul.f32 %v63, %v184
    %v188 = vmul.f32 %v68, %v184
    %189 = vmatprep.subr.mxu0 0.0
    %190 = vmatpush1.msra.mxu0 0.0
    %191 = vmatprep.subr.mxu0 0.0
    %192 = vmatpush1.msra.mxu0 0.0
    %193 = vmatprep.subr.mxu0 0.0
    %194 = vmatpush1.msra.mxu0 0.0
    %195 = vmatprep.subr.mxu0 0.0
    %196 = vmatpush1.msra.mxu0 0.0
    %197 = vmatprep.subr.mxu0 0.0
    %198 = vmatpush1.msra.mxu0 0.0
    %199 = vmatprep.subr.mxu0 0.0
    %200 = vmatpush1.msra.mxu0 0.0
    %201 = vmatprep.subr.mxu0 0.0
    %202 = vmatpush1.msra.mxu0 0.0
    %203 = vmatprep.subr.mxu0 0.0
    %204 = vmatpush1.msra.mxu0 0.0
    %205 = vmatprep.subr.mxu0 0.0
    %206 = vmatpush1.msra.mxu0 0.0
    %207 = vmatprep.subr.mxu0 0.0
    %208 = vmatpush1.msra.mxu0 0.0
    %209 = vmatprep.subr.mxu0 0.0
    %210 = vmatpush1.msra.mxu0 0.0
    %211 = vmatprep.subr.mxu0 0.0
    %212 = vmatpush1.msra.mxu0 0.0
    %213 = vmatprep.subr.mxu0 0.0
    %214 = vmatpush1.msra.mxu0 %v173
    %215 = vmatprep.subr.mxu0 0.0
    %216 = vmatpush1.msra.mxu0 %v168
    %217 = vmatprep.subr.mxu0 0.0
    %218 = vmatpush1.msra.mxu0 %v163
    %219 = vmatprep.subr.mxu0 0.0
    %220 = vmatpush1.msra.mxu0 %v158
    %221 = vmatprep.subr.mxu0 0.0
    %222 = vmatpush2.msra.mxu0 0.0
    %223 = vmatprep.subr.mxu0 0.0
    %224 = vmatpush2.msra.mxu0 0.0
    %225 = vmatprep.subr.mxu0 0.0
    %226 = vmatpush2.msra.mxu0 0.0
    %227 = vmatprep.subr.mxu0 0.0
    %228 = vmatpush2.msra.mxu0 0.0
    %229 = vmatprep.subr.mxu0 0.0
    %230 = vmatpush2.msra.mxu0 0.0
    %231 = vmatprep.subr.mxu0 0.0
    %232 = vmatpush2.msra.mxu0 0.0
    %233 = vmatprep.subr.mxu0 0.0
    %234 = vmatpush2.msra.mxu0 0.0
    %235 = vmatprep.subr.mxu0 0.0
    %236 = vmatpush2.msra.mxu0 0.0
    %237 = vmatprep.subr.mxu0 0.0
    %238 = vmatpush2.msra.mxu0 0.0
    %239 = vmatprep.subr.mxu0 0.0
    %240 = vmatpush2.msra.mxu0 0.0
    %241 = vmatprep.subr.mxu0 0.0
    %242 = vmatpush2.msra.mxu0 0.0
    %243 = vmatprep.subr.mxu0 0.0
    %244 = vmatpush2.msra.mxu0 0.0
    %245 = vmatprep.subr.mxu0 0.0
    %246 = vmatpush2.msra.mxu0 0.0
    %247 = vmatprep.subr.mxu0 0.0
    %248 = vmatpush2.msra.mxu0 0.0
    %249 = vmatprep.subr.mxu0 0.0
    %250 = vmatpush2.msra.mxu0 0.0
    %251 = vmatprep.subr.mxu0 0.0
    %252 = vmatpush2.msra.mxu0 0.0
    %253 = vmatprep.mubr.f32.mxu0 0.0
    %254 = vmatmul.mubr.f32.gmra.mxu0 %v80
    %v255 = vpop.f32.mrf.mxu0
    %v256 = vadd.f32 %v185, %v255
    %v257 = vpop.f32.mrf.mxu0
    %258 = vmatprep.mubr.f32.mxu0 0.0
    %259 = vmatmul.mubr.f32.gmra.mxu0 %v83
    %v260 = vpop.f32.mrf.mxu0
    %v261 = vadd.f32 %v186, %v260
    %v262 = vpop.f32.mrf.mxu0
    %263 = vmatprep.mubr.f32.mxu0 0.0
    %264 = vmatmul.mubr.f32.gmra.mxu0 %v86
    %v265 = vpop.f32.mrf.mxu0
    %v266 = vadd.f32 %v187, %v265
    %v267 = vpop.f32.mrf.mxu0
    %268 = vmatprep.mubr.f32.mxu0 0.0
    %269 = vmatmul.mubr.f32.gmra.mxu0 %v89
    %v270 = vpop.f32.mrf.mxu0
    %v271 = vadd.f32 %v188, %v270
    %v272 = vpop.f32.mrf.mxu0
    %273 = vdwg.mxu0
    %s274 = scalar_lea.vmem [#allocation6], 32
    %275 = vst [vmem:[%s274] sm:$0xff] %v256
    %276 = vst [vmem:[%s274 + $0x8] sm:$0xff] %v261
    %277 = vst [vmem:[%s274 + $0x10] sm:$0xff] %v266
    %278 = vst [vmem:[%s274 + $0x18] sm:$0xff] %v271
    %v279 = vld [vmem:[#allocation3 + $0x2] sm:$0x1]
    %v280 = vlaneseq
    %v281 = vshrl.u32 %v280, 7
    %v282 = vsub.s32 0, %v281
    %v283 = vrot.slane %v279, %v282
    %v284 = vmul.f32 %v53, %v283
    %v285 = vmul.f32 %v58, %v283
    %v286 = vmul.f32 %v63, %v283
    %v287 = vmul.f32 %v68, %v283
    %288 = vmatprep.subr.mxu0 0.0
    %289 = vmatpush1.msra.mxu0 0.0
    %290 = vmatprep.subr.mxu0 0.0
    %291 = vmatpush1.msra.mxu0 0.0
    %292 = vmatprep.subr.mxu0 0.0
    %293 = vmatpush1.msra.mxu0 0.0
    %294 = vmatprep.subr.mxu0 0.0
    %295 = vmatpush1.msra.mxu0 0.0
    %296 = vmatprep.subr.mxu0 0.0
    %297 = vmatpush1.msra.mxu0 0.0
    %298 = vmatprep.subr.mxu0 0.0
    %299 = vmatpush1.msra.mxu0 0.0
    %300 = vmatprep.subr.mxu0 0.0
    %301 = vmatpush1.msra.mxu0 0.0
    %302 = vmatprep.subr.mxu0 0.0
    %303 = vmatpush1.msra.mxu0 0.0
    %304 = vmatprep.subr.mxu0 0.0
    %305 = vmatpush1.msra.mxu0 0.0
    %306 = vmatprep.subr.mxu0 0.0
    %307 = vmatpush1.msra.mxu0 0.0
    %308 = vmatprep.subr.mxu0 0.0
    %309 = vmatpush1.msra.mxu0 0.0
    %310 = vmatprep.subr.mxu0 0.0
    %311 = vmatpush1.msra.mxu0 0.0
    %312 = vmatprep.subr.mxu0 0.0
    %313 = vmatpush1.msra.mxu0 %v271
    %314 = vmatprep.subr.mxu0 0.0
    %315 = vmatpush1.msra.mxu0 %v266
    %316 = vmatprep.subr.mxu0 0.0
    %317 = vmatpush1.msra.mxu0 %v261
    %318 = vmatprep.subr.mxu0 0.0
    %319 = vmatpush1.msra.mxu0 %v256
    %320 = vmatprep.subr.mxu0 0.0
    %321 = vmatpush2.msra.mxu0 0.0
    %322 = vmatprep.subr.mxu0 0.0
    %323 = vmatpush2.msra.mxu0 0.0
    %324 = vmatprep.subr.mxu0 0.0
    %325 = vmatpush2.msra.mxu0 0.0
    %326 = vmatprep.subr.mxu0 0.0
    %327 = vmatpush2.msra.mxu0 0.0
    %328 = vmatprep.subr.mxu0 0.0
    %329 = vmatpush2.msra.mxu0 0.0
    %330 = vmatprep.subr.mxu0 0.0
    %331 = vmatpush2.msra.mxu0 0.0
    %332 = vmatprep.subr.mxu0 0.0
    %333 = vmatpush2.msra.mxu0 0.0
    %334 = vmatprep.subr.mxu0 0.0
    %335 = vmatpush2.msra.mxu0 0.0
    %336 = vmatprep.subr.mxu0 0.0
    %337 = vmatpush2.msra.mxu0 0.0
    %338 = vmatprep.subr.mxu0 0.0
    %339 = vmatpush2.msra.mxu0 0.0
    %340 = vmatprep.subr.mxu0 0.0
    %341 = vmatpush2.msra.mxu0 0.0
    %342 = vmatprep.subr.mxu0 0.0
    %343 = vmatpush2.msra.mxu0 0.0
    %344 = vmatprep.subr.mxu0 0.0
    %345 = vmatpush2.msra.mxu0 0.0
    %346 = vmatprep.subr.mxu0 0.0
    %347 = vmatpush2.msra.mxu0 0.0
    %348 = vmatprep.subr.mxu0 0.0
    %349 = vmatpush2.msra.mxu0 0.0
    %350 = vmatprep.subr.mxu0 0.0
    %351 = vmatpush2.msra.mxu0 0.0
    %352 = vmatprep.mubr.f32.mxu0 0.0
    %353 = vmatmul.mubr.f32.gmra.mxu0 %v80
    %v354 = vpop.f32.mrf.mxu0
    %v355 = vadd.f32 %v284, %v354
    %v356 = vpop.f32.mrf.mxu0
    %357 = vmatprep.mubr.f32.mxu0 0.0
    %358 = vmatmul.mubr.f32.gmra.mxu0 %v83
    %v359 = vpop.f32.mrf.mxu0
    %v360 = vadd.f32 %v285, %v359
    %v361 = vpop.f32.mrf.mxu0
    %362 = vmatprep.mubr.f32.mxu0 0.0
    %363 = vmatmul.mubr.f32.gmra.mxu0 %v86
    %v364 = vpop.f32.mrf.mxu0
    %v365 = vadd.f32 %v286, %v364
    %v366 = vpop.f32.mrf.mxu0
    %367 = vmatprep.mubr.f32.mxu0 0.0
    %368 = vmatmul.mubr.f32.gmra.mxu0 %v89
    %v369 = vpop.f32.mrf.mxu0
    %v370 = vadd.f32 %v287, %v369
    %v371 = vpop.f32.mrf.mxu0
    %372 = vdwg.mxu0
    %s373 = scalar_lea.vmem [#allocation6], 64
    %374 = vst [vmem:[%s373] sm:$0xff] %v355
    %375 = vst [vmem:[%s373 + $0x8] sm:$0xff] %v360
    %376 = vst [vmem:[%s373 + $0x10] sm:$0xff] %v365
    %377 = vst [vmem:[%s373 + $0x18] sm:$0xff] %v370
    %v378 = vld [vmem:[#allocation3 + $0x3] sm:$0x1]
    %v379 = vlaneseq
    %v380 = vshrl.u32 %v379, 7
    %v381 = vsub.s32 0, %v380
    %v382 = vrot.slane %v378, %v381
    %v383 = vmul.f32 %v53, %v382
    %v384 = vmul.f32 %v58, %v382
    %v385 = vmul.f32 %v63, %v382
    %v386 = vmul.f32 %v68, %v382
    %387 = vmatprep.subr.mxu0 0.0
    %388 = vmatpush1.msra.mxu0 0.0
    %389 = vmatprep.subr.mxu0 0.0
    %390 = vmatpush1.msra.mxu0 0.0
    %391 = vmatprep.subr.mxu0 0.0
    %392 = vmatpush1.msra.mxu0 0.0
    %393 = vmatprep.subr.mxu0 0.0
    %394 = vmatpush1.msra.mxu0 0.0
    %395 = vmatprep.subr.mxu0 0.0
    %396 = vmatpush1.msra.mxu0 0.0
    %397 = vmatprep.subr.mxu0 0.0
    %398 = vmatpush1.msra.mxu0 0.0
    %399 = vmatprep.subr.mxu0 0.0
    %400 = vmatpush1.msra.mxu0 0.0
    %401 = vmatprep.subr.mxu0 0.0
    %402 = vmatpush1.msra.mxu0 0.0
    %403 = vmatprep.subr.mxu0 0.0
    %404 = vmatpush1.msra.mxu0 0.0
    %405 = vmatprep.subr.mxu0 0.0
    %406 = vmatpush1.msra.mxu0 0.0
    %407 = vmatprep.subr.mxu0 0.0
    %408 = vmatpush1.msra.mxu0 0.0
    %409 = vmatprep.subr.mxu0 0.0
    %410 = vmatpush1.msra.mxu0 0.0
    %411 = vmatprep.subr.mxu0 0.0
    %412 = vmatpush1.msra.mxu0 %v370
    %413 = vmatprep.subr.mxu0 0.0
    %414 = vmatpush1.msra.mxu0 %v365
    %415 = vmatprep.subr.mxu0 0.0
    %416 = vmatpush1.msra.mxu0 %v360
    %417 = vmatprep.subr.mxu0 0.0
    %418 = vmatpush1.msra.mxu0 %v355
    %419 = vmatprep.subr.mxu0 0.0
    %420 = vmatpush2.msra.mxu0 0.0
    %421 = vmatprep.subr.mxu0 0.0
    %422 = vmatpush2.msra.mxu0 0.0
    %423 = vmatprep.subr.mxu0 0.0
    %424 = vmatpush2.msra.mxu0 0.0
    %425 = vmatprep.subr.mxu0 0.0
    %426 = vmatpush2.msra.mxu0 0.0
    %427 = vmatprep.subr.mxu0 0.0
    %428 = vmatpush2.msra.mxu0 0.0
    %429 = vmatprep.subr.mxu0 0.0
    %430 = vmatpush2.msra.mxu0 0.0
    %431 = vmatprep.subr.mxu0 0.0
    %432 = vmatpush2.msra.mxu0 0.0
    %433 = vmatprep.subr.mxu0 0.0
    %434 = vmatpush2.msra.mxu0 0.0
    %435 = vmatprep.subr.mxu0 0.0
    %436 = vmatpush2.msra.mxu0 0.0
    %437 = vmatprep.subr.mxu0 0.0
    %438 = vmatpush2.msra.mxu0 0.0
    %439 = vmatprep.subr.mxu0 0.0
    %440 = vmatpush2.msra.mxu0 0.0
    %441 = vmatprep.subr.mxu0 0.0
    %442 = vmatpush2.msra.mxu0 0.0
    %443 = vmatprep.subr.mxu0 0.0
    %444 = vmatpush2.msra.mxu0 0.0
    %445 = vmatprep.subr.mxu0 0.0
    %446 = vmatpush2.msra.mxu0 0.0
    %447 = vmatprep.subr.mxu0 0.0
    %448 = vmatpush2.msra.mxu0 0.0
    %449 = vmatprep.subr.mxu0 0.0
    %450 = vmatpush2.msra.mxu0 0.0
    %451 = vmatprep.mubr.f32.mxu0 0.0
    %452 = vmatmul.mubr.f32.gmra.mxu0 %v80
    %v453 = vpop.f32.mrf.mxu0
    %v454 = vadd.f32 %v383, %v453
    %v455 = vpop.f32.mrf.mxu0
    %456 = vmatprep.mubr.f32.mxu0 0.0
    %457 = vmatmul.mubr.f32.gmra.mxu0 %v83
    %v458 = vpop.f32.mrf.mxu0
    %v459 = vadd.f32 %v384, %v458
    %v460 = vpop.f32.mrf.mxu0
    %461 = vmatprep.mubr.f32.mxu0 0.0
    %462 = vmatmul.mubr.f32.gmra.mxu0 %v86
    %v463 = vpop.f32.mrf.mxu0
    %v464 = vadd.f32 %v385, %v463
    %v465 = vpop.f32.mrf.mxu0
    %466 = vmatprep.mubr.f32.mxu0 0.0
    %467 = vmatmul.mubr.f32.gmra.mxu0 %v89
    %v468 = vpop.f32.mrf.mxu0
    %v469 = vadd.f32 %v386, %v468
    %v470 = vpop.f32.mrf.mxu0
    %471 = vdwg.mxu0
    %s472 = scalar_lea.vmem [#allocation6], 96
    %473 = vst [vmem:[%s472] sm:$0xff] %v454
    %474 = vst [vmem:[%s472 + $0x8] sm:$0xff] %v459
    %475 = vst [vmem:[%s472 + $0x10] sm:$0xff] %v464
    %476 = vst [vmem:[%s472 + $0x18] sm:$0xff] %v469
    %v477 = vld [vmem:[#allocation3 + $0x4] sm:$0x1]
    %v478 = vlaneseq
    %v479 = vshrl.u32 %v478, 7
    %v480 = vsub.s32 0, %v479
    %v481 = vrot.slane %v477, %v480
    %v482 = vmul.f32 %v53, %v481
    %v483 = vmul.f32 %v58, %v481
    %v484 = vmul.f32 %v63, %v481
    %v485 = vmul.f32 %v68, %v481
    %486 = vmatprep.subr.mxu0 0.0
    %487 = vmatpush1.msra.mxu0 0.0
    %488 = vmatprep.subr.mxu0 0.0
    %489 = vmatpush1.msra.mxu0 0.0
    %490 = vmatprep.subr.mxu0 0.0
    %491 = vmatpush1.msra.mxu0 0.0
    %492 = vmatprep.subr.mxu0 0.0
    %493 = vmatpush1.msra.mxu0 0.0
    %494 = vmatprep.subr.mxu0 0.0
    %495 = vmatpush1.msra.mxu0 0.0
    %496 = vmatprep.subr.mxu0 0.0
    %497 = vmatpush1.msra.mxu0 0.0
    %498 = vmatprep.subr.mxu0 0.0
    %499 = vmatpush1.msra.mxu0 0.0
    %500 = vmatprep.subr.mxu0 0.0
    %501 = vmatpush1.msra.mxu0 0.0
    %502 = vmatprep.subr.mxu0 0.0
    %503 = vmatpush1.msra.mxu0 0.0
    %504 = vmatprep.subr.mxu0 0.0
    %505 = vmatpush1.msra.mxu0 0.0
    %506 = vmatprep.subr.mxu0 0.0
    %507 = vmatpush1.msra.mxu0 0.0
    %508 = vmatprep.subr.mxu0 0.0
    %509 = vmatpush1.msra.mxu0 0.0
    %510 = vmatprep.subr.mxu0 0.0
    %511 = vmatpush1.msra.mxu0 %v469
    %512 = vmatprep.subr.mxu0 0.0
    %513 = vmatpush1.msra.mxu0 %v464
    %514 = vmatprep.subr.mxu0 0.0
    %515 = vmatpush1.msra.mxu0 %v459
    %516 = vmatprep.subr.mxu0 0.0
    %517 = vmatpush1.msra.mxu0 %v454
    %518 = vmatprep.subr.mxu0 0.0
    %519 = vmatpush2.msra.mxu0 0.0
    %520 = vmatprep.subr.mxu0 0.0
    %521 = vmatpush2.msra.mxu0 0.0
    %522 = vmatprep.subr.mxu0 0.0
    %523 = vmatpush2.msra.mxu0 0.0
    %524 = vmatprep.subr.mxu0 0.0
    %525 = vmatpush2.msra.mxu0 0.0
    %526 = vmatprep.subr.mxu0 0.0
    %527 = vmatpush2.msra.mxu0 0.0
    %528 = vmatprep.subr.mxu0 0.0
    %529 = vmatpush2.msra.mxu0 0.0
    %530 = vmatprep.subr.mxu0 0.0
    %531 = vmatpush2.msra.mxu0 0.0
    %532 = vmatprep.subr.mxu0 0.0
    %533 = vmatpush2.msra.mxu0 0.0
    %534 = vmatprep.subr.mxu0 0.0
    %535 = vmatpush2.msra.mxu0 0.0
    %536 = vmatprep.subr.mxu0 0.0
    %537 = vmatpush2.msra.mxu0 0.0
    %538 = vmatprep.subr.mxu0 0.0
    %539 = vmatpush2.msra.mxu0 0.0
    %540 = vmatprep.subr.mxu0 0.0
    %541 = vmatpush2.msra.mxu0 0.0
    %542 = vmatprep.subr.mxu0 0.0
    %543 = vmatpush2.msra.mxu0 0.0
    %544 = vmatprep.subr.mxu0 0.0
    %545 = vmatpush2.msra.mxu0 0.0
    %546 = vmatprep.subr.mxu0 0.0
    %547 = vmatpush2.msra.mxu0 0.0
    %548 = vmatprep.subr.mxu0 0.0
    %549 = vmatpush2.msra.mxu0 0.0
    %550 = vmatprep.mubr.f32.mxu0 0.0
    %551 = vmatmul.mubr.f32.gmra.mxu0 %v80
    %v552 = vpop.f32.mrf.mxu0
    %v553 = vadd.f32 %v482, %v552
    %v554 = vpop.f32.mrf.mxu0
    %555 = vmatprep.mubr.f32.mxu0 0.0
    %556 = vmatmul.mubr.f32.gmra.mxu0 %v83
    %v557 = vpop.f32.mrf.mxu0
    %v558 = vadd.f32 %v483, %v557
    %v559 = vpop.f32.mrf.mxu0
    %560 = vmatprep.mubr.f32.mxu0 0.0
    %561 = vmatmul.mubr.f32.gmra.mxu0 %v86
    %v562 = vpop.f32.mrf.mxu0
    %v563 = vadd.f32 %v484, %v562
    %v564 = vpop.f32.mrf.mxu0
    %565 = vmatprep.mubr.f32.mxu0 0.0
    %566 = vmatmul.mubr.f32.gmra.mxu0 %v89
    %v567 = vpop.f32.mrf.mxu0
    %v568 = vadd.f32 %v485, %v567
    %v569 = vpop.f32.mrf.mxu0
    %570 = vdwg.mxu0
    %s571 = scalar_lea.vmem [#allocation6], 128
    %572 = vst [vmem:[%s571] sm:$0xff] %v553
    %573 = vst [vmem:[%s571 + $0x8] sm:$0xff] %v558
    %574 = vst [vmem:[%s571 + $0x10] sm:$0xff] %v563
    %575 = vst [vmem:[%s571 + $0x18] sm:$0xff] %v568
    %v576 = vld [vmem:[#allocation3 + $0x5] sm:$0x1]
    %v577 = vlaneseq
    %v578 = vshrl.u32 %v577, 7
    %v579 = vsub.s32 0, %v578
    %v580 = vrot.slane %v576, %v579
    %v581 = vmul.f32 %v53, %v580
    %v582 = vmul.f32 %v58, %v580
    %v583 = vmul.f32 %v63, %v580
    %v584 = vmul.f32 %v68, %v580
    %585 = vmatprep.subr.mxu0 0.0
    %586 = vmatpush1.msra.mxu0 0.0
    %587 = vmatprep.subr.mxu0 0.0
    %588 = vmatpush1.msra.mxu0 0.0
    %589 = vmatprep.subr.mxu0 0.0
    %590 = vmatpush1.msra.mxu0 0.0
    %591 = vmatprep.subr.mxu0 0.0
    %592 = vmatpush1.msra.mxu0 0.0
    %593 = vmatprep.subr.mxu0 0.0
    %594 = vmatpush1.msra.mxu0 0.0
    %595 = vmatprep.subr.mxu0 0.0
    %596 = vmatpush1.msra.mxu0 0.0
    %597 = vmatprep.subr.mxu0 0.0
    %598 = vmatpush1.msra.mxu0 0.0
    %599 = vmatprep.subr.mxu0 0.0
    %600 = vmatpush1.msra.mxu0 0.0
    %601 = vmatprep.subr.mxu0 0.0
    %602 = vmatpush1.msra.mxu0 0.0
    %603 = vmatprep.subr.mxu0 0.0
    %604 = vmatpush1.msra.mxu0 0.0
    %605 = vmatprep.subr.mxu0 0.0
    %606 = vmatpush1.msra.mxu0 0.0
    %607 = vmatprep.subr.mxu0 0.0
    %608 = vmatpush1.msra.mxu0 0.0
    %609 = vmatprep.subr.mxu0 0.0
    %610 = vmatpush1.msra.mxu0 %v568
    %611 = vmatprep.subr.mxu0 0.0
    %612 = vmatpush1.msra.mxu0 %v563
    %613 = vmatprep.subr.mxu0 0.0
    %614 = vmatpush1.msra.mxu0 %v558
    %615 = vmatprep.subr.mxu0 0.0
    %616 = vmatpush1.msra.mxu0 %v553
    %617 = vmatprep.subr.mxu0 0.0
    %618 = vmatpush2.msra.mxu0 0.0
    %619 = vmatprep.subr.mxu0 0.0
    %620 = vmatpush2.msra.mxu0 0.0
    %621 = vmatprep.subr.mxu0 0.0
    %622 = vmatpush2.msra.mxu0 0.0
    %623 = vmatprep.subr.mxu0 0.0
    %624 = vmatpush2.msra.mxu0 0.0
    %625 = vmatprep.subr.mxu0 0.0
    %626 = vmatpush2.msra.mxu0 0.0
    %627 = vmatprep.subr.mxu0 0.0
    %628 = vmatpush2.msra.mxu0 0.0
    %629 = vmatprep.subr.mxu0 0.0
    %630 = vmatpush2.msra.mxu0 0.0
    %631 = vmatprep.subr.mxu0 0.0
    %632 = vmatpush2.msra.mxu0 0.0
    %633 = vmatprep.subr.mxu0 0.0
    %634 = vmatpush2.msra.mxu0 0.0
    %635 = vmatprep.subr.mxu0 0.0
    %636 = vmatpush2.msra.mxu0 0.0
    %637 = vmatprep.subr.mxu0 0.0
    %638 = vmatpush2.msra.mxu0 0.0
    %639 = vmatprep.subr.mxu0 0.0
    %640 = vmatpush2.msra.mxu0 0.0
    %641 = vmatprep.subr.mxu0 0.0
    %642 = vmatpush2.msra.mxu0 0.0
    %643 = vmatprep.subr.mxu0 0.0
    %644 = vmatpush2.msra.mxu0 0.0
    %645 = vmatprep.subr.mxu0 0.0
    %646 = vmatpush2.msra.mxu0 0.0
    %647 = vmatprep.subr.mxu0 0.0
    %648 = vmatpush2.msra.mxu0 0.0
    %649 = vmatprep.mubr.f32.mxu0 0.0
    %650 = vmatmul.mubr.f32.gmra.mxu0 %v80
    %v651 = vpop.f32.mrf.mxu0
    %v652 = vadd.f32 %v581, %v651
    %v653 = vpop.f32.mrf.mxu0
    %654 = vmatprep.mubr.f32.mxu0 0.0
    %655 = vmatmul.mubr.f32.gmra.mxu0 %v83
    %v656 = vpop.f32.mrf.mxu0
    %v657 = vadd.f32 %v582, %v656
    %v658 = vpop.f32.mrf.mxu0
    %659 = vmatprep.mubr.f32.mxu0 0.0
    %660 = vmatmul.mubr.f32.gmra.mxu0 %v86
    %v661 = vpop.f32.mrf.mxu0
    %v662 = vadd.f32 %v583, %v661
    %v663 = vpop.f32.mrf.mxu0
    %664 = vmatprep.mubr.f32.mxu0 0.0
    %665 = vmatmul.mubr.f32.gmra.mxu0 %v89
    %v666 = vpop.f32.mrf.mxu0
    %v667 = vadd.f32 %v584, %v666
    %v668 = vpop.f32.mrf.mxu0
    %669 = vdwg.mxu0
    %s670 = scalar_lea.vmem [#allocation6], 160
    %671 = vst [vmem:[%s670] sm:$0xff] %v652
    %672 = vst [vmem:[%s670 + $0x8] sm:$0xff] %v657
    %673 = vst [vmem:[%s670 + $0x10] sm:$0xff] %v662
    %674 = vst [vmem:[%s670 + $0x18] sm:$0xff] %v667
    %v675 = vld [vmem:[#allocation3 + $0x6] sm:$0x1]
    %v676 = vlaneseq
    %v677 = vshrl.u32 %v676, 7
    %v678 = vsub.s32 0, %v677
    %v679 = vrot.slane %v675, %v678
    %v680 = vmul.f32 %v53, %v679
    %v681 = vmul.f32 %v58, %v679
    %v682 = vmul.f32 %v63, %v679
    %v683 = vmul.f32 %v68, %v679
    %684 = vmatprep.subr.mxu0 0.0
    %685 = vmatpush1.msra.mxu0 0.0
    %686 = vmatprep.subr.mxu0 0.0
    %687 = vmatpush1.msra.mxu0 0.0
    %688 = vmatprep.subr.mxu0 0.0
    %689 = vmatpush1.msra.mxu0 0.0
    %690 = vmatprep.subr.mxu0 0.0
    %691 = vmatpush1.msra.mxu0 0.0
    %692 = vmatprep.subr.mxu0 0.0
    %693 = vmatpush1.msra.mxu0 0.0
    %694 = vmatprep.subr.mxu0 0.0
    %695 = vmatpush1.msra.mxu0 0.0
    %696 = vmatprep.subr.mxu0 0.0
    %697 = vmatpush1.msra.mxu0 0.0
    %698 = vmatprep.subr.mxu0 0.0
    %699 = vmatpush1.msra.mxu0 0.0
    %700 = vmatprep.subr.mxu0 0.0
    %701 = vmatpush1.msra.mxu0 0.0
    %702 = vmatprep.subr.mxu0 0.0
    %703 = vmatpush1.msra.mxu0 0.0
    %704 = vmatprep.subr.mxu0 0.0
    %705 = vmatpush1.msra.mxu0 0.0
    %706 = vmatprep.subr.mxu0 0.0
    %707 = vmatpush1.msra.mxu0 0.0
    %708 = vmatprep.subr.mxu0 0.0
    %709 = vmatpush1.msra.mxu0 %v667
    %710 = vmatprep.subr.mxu0 0.0
    %711 = vmatpush1.msra.mxu0 %v662
    %712 = vmatprep.subr.mxu0 0.0
    %713 = vmatpush1.msra.mxu0 %v657
    %714 = vmatprep.subr.mxu0 0.0
    %715 = vmatpush1.msra.mxu0 %v652
    %716 = vmatprep.subr.mxu0 0.0
    %717 = vmatpush2.msra.mxu0 0.0
    %718 = vmatprep.subr.mxu0 0.0
    %719 = vmatpush2.msra.mxu0 0.0
    %720 = vmatprep.subr.mxu0 0.0
    %721 = vmatpush2.msra.mxu0 0.0
    %722 = vmatprep.subr.mxu0 0.0
    %723 = vmatpush2.msra.mxu0 0.0
    %724 = vmatprep.subr.mxu0 0.0
    %725 = vmatpush2.msra.mxu0 0.0
    %726 = vmatprep.subr.mxu0 0.0
    %727 = vmatpush2.msra.mxu0 0.0
    %728 = vmatprep.subr.mxu0 0.0
    %729 = vmatpush2.msra.mxu0 0.0
    %730 = vmatprep.subr.mxu0 0.0
    %731 = vmatpush2.msra.mxu0 0.0
    %732 = vmatprep.subr.mxu0 0.0
    %733 = vmatpush2.msra.mxu0 0.0
    %734 = vmatprep.subr.mxu0 0.0
    %735 = vmatpush2.msra.mxu0 0.0
    %736 = vmatprep.subr.mxu0 0.0
    %737 = vmatpush2.msra.mxu0 0.0
    %738 = vmatprep.subr.mxu0 0.0
    %739 = vmatpush2.msra.mxu0 0.0
    %740 = vmatprep.subr.mxu0 0.0
    %741 = vmatpush2.msra.mxu0 0.0
    %742 = vmatprep.subr.mxu0 0.0
    %743 = vmatpush2.msra.mxu0 0.0
    %744 = vmatprep.subr.mxu0 0.0
    %745 = vmatpush2.msra.mxu0 0.0
    %746 = vmatprep.subr.mxu0 0.0
    %747 = vmatpush2.msra.mxu0 0.0
    %748 = vmatprep.mubr.f32.mxu0 0.0
    %749 = vmatmul.mubr.f32.gmra.mxu0 %v80
    %v750 = vpop.f32.mrf.mxu0
    %v751 = vadd.f32 %v680, %v750
    %v752 = vpop.f32.mrf.mxu0
    %753 = vmatprep.mubr.f32.mxu0 0.0
    %754 = vmatmul.mubr.f32.gmra.mxu0 %v83
    %v755 = vpop.f32.mrf.mxu0
    %v756 = vadd.f32 %v681, %v755
    %v757 = vpop.f32.mrf.mxu0
    %758 = vmatprep.mubr.f32.mxu0 0.0
    %759 = vmatmul.mubr.f32.gmra.mxu0 %v86
    %v760 = vpop.f32.mrf.mxu0
    %v761 = vadd.f32 %v682, %v760
    %v762 = vpop.f32.mrf.mxu0
    %763 = vmatprep.mubr.f32.mxu0 0.0
    %764 = vmatmul.mubr.f32.gmra.mxu0 %v89
    %v765 = vpop.f32.mrf.mxu0
    %v766 = vadd.f32 %v683, %v765
    %v767 = vpop.f32.mrf.mxu0
    %768 = vdwg.mxu0
    %s769 = scalar_lea.vmem [#allocation6], 192
    %770 = vst [vmem:[%s769] sm:$0xff] %v751
    %771 = vst [vmem:[%s769 + $0x8] sm:$0xff] %v756
    %772 = vst [vmem:[%s769 + $0x10] sm:$0xff] %v761
    %773 = vst [vmem:[%s769 + $0x18] sm:$0xff] %v766
    %v774 = vld [vmem:[#allocation3 + $0x7] sm:$0x1]
    %v775 = vlaneseq
    %v776 = vshrl.u32 %v775, 7
    %v777 = vsub.s32 0, %v776
    %v778 = vrot.slane %v774, %v777
    %v779 = vmul.f32 %v53, %v778
    %v780 = vmul.f32 %v58, %v778
    %v781 = vmul.f32 %v63, %v778
    %v782 = vmul.f32 %v68, %v778
    %783 = vmatprep.subr.mxu0 0.0
    %784 = vmatpush1.msra.mxu0 0.0
    %785 = vmatprep.subr.mxu0 0.0
    %786 = vmatpush1.msra.mxu0 0.0
    %787 = vmatprep.subr.mxu0 0.0
    %788 = vmatpush1.msra.mxu0 0.0
    %789 = vmatprep.subr.mxu0 0.0
    %790 = vmatpush1.msra.mxu0 0.0
    %791 = vmatprep.subr.mxu0 0.0
    %792 = vmatpush1.msra.mxu0 0.0
    %793 = vmatprep.subr.mxu0 0.0
    %794 = vmatpush1.msra.mxu0 0.0
    %795 = vmatprep.subr.mxu0 0.0
    %796 = vmatpush1.msra.mxu0 0.0
    %797 = vmatprep.subr.mxu0 0.0
    %798 = vmatpush1.msra.mxu0 0.0
    %799 = vmatprep.subr.mxu0 0.0
    %800 = vmatpush1.msra.mxu0 0.0
    %801 = vmatprep.subr.mxu0 0.0
    %802 = vmatpush1.msra.mxu0 0.0
    %803 = vmatprep.subr.mxu0 0.0
    %804 = vmatpush1.msra.mxu0 0.0
    %805 = vmatprep.subr.mxu0 0.0
    %806 = vmatpush1.msra.mxu0 0.0
    %807 = vmatprep.subr.mxu0 0.0
    %808 = vmatpush1.msra.mxu0 %v766
    %809 = vmatprep.subr.mxu0 0.0
    %810 = vmatpush1.msra.mxu0 %v761
    %811 = vmatprep.subr.mxu0 0.0
    %812 = vmatpush1.msra.mxu0 %v756
    %813 = vmatprep.subr.mxu0 0.0
    %814 = vmatpush1.msra.mxu0 %v751
    %815 = vmatprep.subr.mxu0 0.0
    %816 = vmatpush2.msra.mxu0 0.0
    %817 = vmatprep.subr.mxu0 0.0
    %818 = vmatpush2.msra.mxu0 0.0
    %819 = vmatprep.subr.mxu0 0.0
    %820 = vmatpush2.msra.mxu0 0.0
    %821 = vmatprep.subr.mxu0 0.0
    %822 = vmatpush2.msra.mxu0 0.0
    %823 = vmatprep.subr.mxu0 0.0
    %824 = vmatpush2.msra.mxu0 0.0
    %825 = vmatprep.subr.mxu0 0.0
    %826 = vmatpush2.msra.mxu0 0.0
    %827 = vmatprep.subr.mxu0 0.0
    %828 = vmatpush2.msra.mxu0 0.0
    %829 = vmatprep.subr.mxu0 0.0
    %830 = vmatpush2.msra.mxu0 0.0
    %831 = vmatprep.subr.mxu0 0.0
    %832 = vmatpush2.msra.mxu0 0.0
    %833 = vmatprep.subr.mxu0 0.0
    %834 = vmatpush2.msra.mxu0 0.0
    %835 = vmatprep.subr.mxu0 0.0
    %836 = vmatpush2.msra.mxu0 0.0
    %837 = vmatprep.subr.mxu0 0.0
    %838 = vmatpush2.msra.mxu0 0.0
    %839 = vmatprep.subr.mxu0 0.0
    %840 = vmatpush2.msra.mxu0 0.0
    %841 = vmatprep.subr.mxu0 0.0
    %842 = vmatpush2.msra.mxu0 0.0
    %843 = vmatprep.subr.mxu0 0.0
    %844 = vmatpush2.msra.mxu0 0.0
    %845 = vmatprep.subr.mxu0 0.0
    %846 = vmatpush2.msra.mxu0 0.0
    %847 = vmatprep.mubr.f32.mxu0 0.0
    %848 = vmatmul.mubr.f32.gmra.mxu0 %v80
    %v849 = vpop.f32.mrf.mxu0
    %v850 = vadd.f32 %v779, %v849
    %v851 = vpop.f32.mrf.mxu0
    %852 = vmatprep.mubr.f32.mxu0 0.0
    %853 = vmatmul.mubr.f32.gmra.mxu0 %v83
    %v854 = vpop.f32.mrf.mxu0
    %v855 = vadd.f32 %v780, %v854
    %v856 = vpop.f32.mrf.mxu0
    %857 = vmatprep.mubr.f32.mxu0 0.0
    %858 = vmatmul.mubr.f32.gmra.mxu0 %v86
    %v859 = vpop.f32.mrf.mxu0
    %v860 = vadd.f32 %v781, %v859
    %v861 = vpop.f32.mrf.mxu0
    %862 = vmatprep.mubr.f32.mxu0 0.0
    %863 = vmatmul.mubr.f32.gmra.mxu0 %v89
    %v864 = vpop.f32.mrf.mxu0
    %v865 = vadd.f32 %v782, %v864
    %v866 = vpop.f32.mrf.mxu0
    %867 = vdwg.mxu0
    %s868 = scalar_lea.vmem [#allocation6], 224
    %869 = vst [vmem:[%s868] sm:$0xff] %v850
    %870 = vst [vmem:[%s868 + $0x8] sm:$0xff] %v855
    %871 = vst [vmem:[%s868 + $0x10] sm:$0xff] %v860
    %872 = vst [vmem:[%s868 + $0x18] sm:$0xff] %v865
    %v873 = vld [vmem:[#allocation3 + $0x8] sm:$0x1]
    %v874 = vlaneseq
    %v875 = vshrl.u32 %v874, 7
    %v876 = vsub.s32 0, %v875
    %v877 = vrot.slane %v873, %v876
    %v878 = vmul.f32 %v53, %v877
    %v879 = vmul.f32 %v58, %v877
    %v880 = vmul.f32 %v63, %v877
    %v881 = vmul.f32 %v68, %v877
    %882 = vmatprep.subr.mxu0 0.0
    %883 = vmatpush1.msra.mxu0 0.0
    %884 = vmatprep.subr.mxu0 0.0
    %885 = vmatpush1.msra.mxu0 0.0
    %886 = vmatprep.subr.mxu0 0.0
    %887 = vmatpush1.msra.mxu0 0.0
    %888 = vmatprep.subr.mxu0 0.0
    %889 = vmatpush1.msra.mxu0 0.0
    %890 = vmatprep.subr.mxu0 0.0
    %891 = vmatpush1.msra.mxu0 0.0
    %892 = vmatprep.subr.mxu0 0.0
    %893 = vmatpush1.msra.mxu0 0.0
    %894 = vmatprep.subr.mxu0 0.0
    %895 = vmatpush1.msra.mxu0 0.0
    %896 = vmatprep.subr.mxu0 0.0
    %897 = vmatpush1.msra.mxu0 0.0
    %898 = vmatprep.subr.mxu0 0.0
    %899 = vmatpush1.msra.mxu0 0.0
    %900 = vmatprep.subr.mxu0 0.0
    %901 = vmatpush1.msra.mxu0 0.0
    %902 = vmatprep.subr.mxu0 0.0
    %903 = vmatpush1.msra.mxu0 0.0
    %904 = vmatprep.subr.mxu0 0.0
    %905 = vmatpush1.msra.mxu0 0.0
    %906 = vmatprep.subr.mxu0 0.0
    %907 = vmatpush1.msra.mxu0 %v865
    %908 = vmatprep.subr.mxu0 0.0
    %909 = vmatpush1.msra.mxu0 %v860
    %910 = vmatprep.subr.mxu0 0.0
    %911 = vmatpush1.msra.mxu0 %v855
    %912 = vmatprep.subr.mxu0 0.0
    %913 = vmatpush1.msra.mxu0 %v850
    %914 = vmatprep.subr.mxu0 0.0
    %915 = vmatpush2.msra.mxu0 0.0
    %916 = vmatprep.subr.mxu0 0.0
    %917 = vmatpush2.msra.mxu0 0.0
    %918 = vmatprep.subr.mxu0 0.0
    %919 = vmatpush2.msra.mxu0 0.0
    %920 = vmatprep.subr.mxu0 0.0
    %921 = vmatpush2.msra.mxu0 0.0
    %922 = vmatprep.subr.mxu0 0.0
    %923 = vmatpush2.msra.mxu0 0.0
    %924 = vmatprep.subr.mxu0 0.0
    %925 = vmatpush2.msra.mxu0 0.0
    %926 = vmatprep.subr.mxu0 0.0
    %927 = vmatpush2.msra.mxu0 0.0
    %928 = vmatprep.subr.mxu0 0.0
    %929 = vmatpush2.msra.mxu0 0.0
    %930 = vmatprep.subr.mxu0 0.0
    %931 = vmatpush2.msra.mxu0 0.0
    %932 = vmatprep.subr.mxu0 0.0
    %933 = vmatpush2.msra.mxu0 0.0
    %934 = vmatprep.subr.mxu0 0.0
    %935 = vmatpush2.msra.mxu0 0.0
    %936 = vmatprep.subr.mxu0 0.0
    %937 = vmatpush2.msra.mxu0 0.0
    %938 = vmatprep.subr.mxu0 0.0
    %939 = vmatpush2.msra.mxu0 0.0
    %940 = vmatprep.subr.mxu0 0.0
    %941 = vmatpush2.msra.mxu0 0.0
    %942 = vmatprep.subr.mxu0 0.0
    %943 = vmatpush2.msra.mxu0 0.0
    %944 = vmatprep.subr.mxu0 0.0
    %945 = vmatpush2.msra.mxu0 0.0
    %946 = vmatprep.mubr.f32.mxu0 0.0
    %947 = vmatmul.mubr.f32.gmra.mxu0 %v80
    %v948 = vpop.f32.mrf.mxu0
    %v949 = vadd.f32 %v878, %v948
    %v950 = vpop.f32.mrf.mxu0
    %951 = vmatprep.mubr.f32.mxu0 0.0
    %952 = vmatmul.mubr.f32.gmra.mxu0 %v83
    %v953 = vpop.f32.mrf.mxu0
    %v954 = vadd.f32 %v879, %v953
    %v955 = vpop.f32.mrf.mxu0
    %956 = vmatprep.mubr.f32.mxu0 0.0
    %957 = vmatmul.mubr.f32.gmra.mxu0 %v86
    %v958 = vpop.f32.mrf.mxu0
    %v959 = vadd.f32 %v880, %v958
    %v960 = vpop.f32.mrf.mxu0
    %961 = vmatprep.mubr.f32.mxu0 0.0
    %962 = vmatmul.mubr.f32.gmra.mxu0 %v89
    %v963 = vpop.f32.mrf.mxu0
    %v964 = vadd.f32 %v881, %v963
    %v965 = vpop.f32.mrf.mxu0
    %966 = vdwg.mxu0
    %s967 = scalar_lea.vmem [#allocation6], 256
    %968 = vst [vmem:[%s967] sm:$0xff] %v949
    %969 = vst [vmem:[%s967 + $0x8] sm:$0xff] %v954
    %970 = vst [vmem:[%s967 + $0x10] sm:$0xff] %v959
    %971 = vst [vmem:[%s967 + $0x18] sm:$0xff] %v964
    %v972 = vld [vmem:[#allocation3 + $0x9] sm:$0x1]
    %v973 = vlaneseq
    %v974 = vshrl.u32 %v973, 7
    %v975 = vsub.s32 0, %v974
    %v976 = vrot.slane %v972, %v975
    %v977 = vmul.f32 %v53, %v976
    %v978 = vmul.f32 %v58, %v976
    %v979 = vmul.f32 %v63, %v976
    %v980 = vmul.f32 %v68, %v976
    %981 = vmatprep.subr.mxu0 0.0
    %982 = vmatpush1.msra.mxu0 0.0
    %983 = vmatprep.subr.mxu0 0.0
    %984 = vmatpush1.msra.mxu0 0.0
    %985 = vmatprep.subr.mxu0 0.0
    %986 = vmatpush1.msra.mxu0 0.0
    %987 = vmatprep.subr.mxu0 0.0
    %988 = vmatpush1.msra.mxu0 0.0
    %989 = vmatprep.subr.mxu0 0.0
    %990 = vmatpush1.msra.mxu0 0.0
    %991 = vmatprep.subr.mxu0 0.0
    %992 = vmatpush1.msra.mxu0 0.0
    %993 = vmatprep.subr.mxu0 0.0
    %994 = vmatpush1.msra.mxu0 0.0
    %995 = vmatprep.subr.mxu0 0.0
    %996 = vmatpush1.msra.mxu0 0.0
    %997 = vmatprep.subr.mxu0 0.0
    %998 = vmatpush1.msra.mxu0 0.0
    %999 = vmatprep.subr.mxu0 0.0
    %1000 = vmatpush1.msra.mxu0 0.0
    %1001 = vmatprep.subr.mxu0 0.0
    %1002 = vmatpush1.msra.mxu0 0.0
    %1003 = vmatprep.subr.mxu0 0.0
    %1004 = vmatpush1.msra.mxu0 0.0
    %1005 = vmatprep.subr.mxu0 0.0
    %1006 = vmatpush1.msra.mxu0 %v964
    %1007 = vmatprep.subr.mxu0 0.0
    %1008 = vmatpush1.msra.mxu0 %v959
    %1009 = vmatprep.subr.mxu0 0.0
    %1010 = vmatpush1.msra.mxu0 %v954
    %1011 = vmatprep.subr.mxu0 0.0
    %1012 = vmatpush1.msra.mxu0 %v949
    %1013 = vmatprep.subr.mxu0 0.0
    %1014 = vmatpush2.msra.mxu0 0.0
    %1015 = vmatprep.subr.mxu0 0.0
    %1016 = vmatpush2.msra.mxu0 0.0
    %1017 = vmatprep.subr.mxu0 0.0
    %1018 = vmatpush2.msra.mxu0 0.0
    %1019 = vmatprep.subr.mxu0 0.0
    %1020 = vmatpush2.msra.mxu0 0.0
    %1021 = vmatprep.subr.mxu0 0.0
    %1022 = vmatpush2.msra.mxu0 0.0
    %1023 = vmatprep.subr.mxu0 0.0
    %1024 = vmatpush2.msra.mxu0 0.0
    %1025 = vmatprep.subr.mxu0 0.0
    %1026 = vmatpush2.msra.mxu0 0.0
    %1027 = vmatprep.subr.mxu0 0.0
    %1028 = vmatpush2.msra.mxu0 0.0
    %1029 = vmatprep.subr.mxu0 0.0
    %1030 = vmatpush2.msra.mxu0 0.0
    %1031 = vmatprep.subr.mxu0 0.0
    %1032 = vmatpush2.msra.mxu0 0.0
    %1033 = vmatprep.subr.mxu0 0.0
    %1034 = vmatpush2.msra.mxu0 0.0
    %1035 = vmatprep.subr.mxu0 0.0
    %1036 = vmatpush2.msra.mxu0 0.0
    %1037 = vmatprep.subr.mxu0 0.0
    %1038 = vmatpush2.msra.mxu0 0.0
    %1039 = vmatprep.subr.mxu0 0.0
    %1040 = vmatpush2.msra.mxu0 0.0
    %1041 = vmatprep.subr.mxu0 0.0
    %1042 = vmatpush2.msra.mxu0 0.0
    %1043 = vmatprep.subr.mxu0 0.0
    %1044 = vmatpush2.msra.mxu0 0.0
    %1045 = vmatprep.mubr.f32.mxu0 0.0
    %1046 = vmatmul.mubr.f32.gmra.mxu0 %v80
    %v1047 = vpop.f32.mrf.mxu0
    %v1048 = vadd.f32 %v977, %v1047
    %v1049 = vpop.f32.mrf.mxu0
    %1050 = vmatprep.mubr.f32.mxu0 0.0
    %1051 = vmatmul.mubr.f32.gmra.mxu0 %v83
    %v1052 = vpop.f32.mrf.mxu0
    %v1053 = vadd.f32 %v978, %v1052
    %v1054 = vpop.f32.mrf.mxu0
    %1055 = vmatprep.mubr.f32.mxu0 0.0
    %1056 = vmatmul.mubr.f32.gmra.mxu0 %v86
    %v1057 = vpop.f32.mrf.mxu0
    %v1058 = vadd.f32 %v979, %v1057
    %v1059 = vpop.f32.mrf.mxu0
    %1060 = vmatprep.mubr.f32.mxu0 0.0
    %1061 = vmatmul.mubr.f32.gmra.mxu0 %v89
    %v1062 = vpop.f32.mrf.mxu0
    %v1063 = vadd.f32 %v980, %v1062
    %v1064 = vpop.f32.mrf.mxu0
    %1065 = vdwg.mxu0
    %s1066 = scalar_lea.vmem [#allocation6], 288
    %1067 = vst [vmem:[%s1066] sm:$0xff] %v1048
    %1068 = vst [vmem:[%s1066 + $0x8] sm:$0xff] %v1053
    %1069 = vst [vmem:[%s1066 + $0x10] sm:$0xff] %v1058
    %1070 = vst [vmem:[%s1066 + $0x18] sm:$0xff] %v1063
    %v1071 = vld [vmem:[#allocation3 + $0xa] sm:$0x1]
    %v1072 = vlaneseq
    %v1073 = vshrl.u32 %v1072, 7
    %v1074 = vsub.s32 0, %v1073
    %v1075 = vrot.slane %v1071, %v1074
    %v1076 = vmul.f32 %v53, %v1075
    %v1077 = vmul.f32 %v58, %v1075
    %v1078 = vmul.f32 %v63, %v1075
    %v1079 = vmul.f32 %v68, %v1075
    %1080 = vmatprep.subr.mxu0 0.0
    %1081 = vmatpush1.msra.mxu0 0.0
    %1082 = vmatprep.subr.mxu0 0.0
    %1083 = vmatpush1.msra.mxu0 0.0
    %1084 = vmatprep.subr.mxu0 0.0
    %1085 = vmatpush1.msra.mxu0 0.0
    %1086 = vmatprep.subr.mxu0 0.0
    %1087 = vmatpush1.msra.mxu0 0.0
    %1088 = vmatprep.subr.mxu0 0.0
    %1089 = vmatpush1.msra.mxu0 0.0
    %1090 = vmatprep.subr.mxu0 0.0
    %1091 = vmatpush1.msra.mxu0 0.0
    %1092 = vmatprep.subr.mxu0 0.0
    %1093 = vmatpush1.msra.mxu0 0.0
    %1094 = vmatprep.subr.mxu0 0.0
    %1095 = vmatpush1.msra.mxu0 0.0
    %1096 = vmatprep.subr.mxu0 0.0
    %1097 = vmatpush1.msra.mxu0 0.0
    %1098 = vmatprep.subr.mxu0 0.0
    %1099 = vmatpush1.msra.mxu0 0.0
    %1100 = vmatprep.subr.mxu0 0.0
    %1101 = vmatpush1.msra.mxu0 0.0
    %1102 = vmatprep.subr.mxu0 0.0
    %1103 = vmatpush1.msra.mxu0 0.0
    %1104 = vmatprep.subr.mxu0 0.0
    %1105 = vmatpush1.msra.mxu0 %v1063
    %1106 = vmatprep.subr.mxu0 0.0
    %1107 = vmatpush1.msra.mxu0 %v1058
    %1108 = vmatprep.subr.mxu0 0.0
    %1109 = vmatpush1.msra.mxu0 %v1053
    %1110 = vmatprep.subr.mxu0 0.0
    %1111 = vmatpush1.msra.mxu0 %v1048
    %1112 = vmatprep.subr.mxu0 0.0
    %1113 = vmatpush2.msra.mxu0 0.0
    %1114 = vmatprep.subr.mxu0 0.0
    %1115 = vmatpush2.msra.mxu0 0.0
    %1116 = vmatprep.subr.mxu0 0.0
    %1117 = vmatpush2.msra.mxu0 0.0
    %1118 = vmatprep.subr.mxu0 0.0
    %1119 = vmatpush2.msra.mxu0 0.0
    %1120 = vmatprep.subr.mxu0 0.0
    %1121 = vmatpush2.msra.mxu0 0.0
    %1122 = vmatprep.subr.mxu0 0.0
    %1123 = vmatpush2.msra.mxu0 0.0
    %1124 = vmatprep.subr.mxu0 0.0
    %1125 = vmatpush2.msra.mxu0 0.0
    %1126 = vmatprep.subr.mxu0 0.0
    %1127 = vmatpush2.msra.mxu0 0.0
    %1128 = vmatprep.subr.mxu0 0.0
    %1129 = vmatpush2.msra.mxu0 0.0
    %1130 = vmatprep.subr.mxu0 0.0
    %1131 = vmatpush2.msra.mxu0 0.0
    %1132 = vmatprep.subr.mxu0 0.0
    %1133 = vmatpush2.msra.mxu0 0.0
    %1134 = vmatprep.subr.mxu0 0.0
    %1135 = vmatpush2.msra.mxu0 0.0
    %1136 = vmatprep.subr.mxu0 0.0
    %1137 = vmatpush2.msra.mxu0 0.0
    %1138 = vmatprep.subr.mxu0 0.0
    %1139 = vmatpush2.msra.mxu0 0.0
    %1140 = vmatprep.subr.mxu0 0.0
    %1141 = vmatpush2.msra.mxu0 0.0
    %1142 = vmatprep.subr.mxu0 0.0
    %1143 = vmatpush2.msra.mxu0 0.0
    %1144 = vmatprep.mubr.f32.mxu0 0.0
    %1145 = vmatmul.mubr.f32.gmra.mxu0 %v80
    %v1146 = vpop.f32.mrf.mxu0
    %v1147 = vadd.f32 %v1076, %v1146
    %v1148 = vpop.f32.mrf.mxu0
    %1149 = vmatprep.mubr.f32.mxu0 0.0
    %1150 = vmatmul.mubr.f32.gmra.mxu0 %v83
    %v1151 = vpop.f32.mrf.mxu0
    %v1152 = vadd.f32 %v1077, %v1151
    %v1153 = vpop.f32.mrf.mxu0
    %1154 = vmatprep.mubr.f32.mxu0 0.0
    %1155 = vmatmul.mubr.f32.gmra.mxu0 %v86
    %v1156 = vpop.f32.mrf.mxu0
    %v1157 = vadd.f32 %v1078, %v1156
    %v1158 = vpop.f32.mrf.mxu0
    %1159 = vmatprep.mubr.f32.mxu0 0.0
    %1160 = vmatmul.mubr.f32.gmra.mxu0 %v89
    %v1161 = vpop.f32.mrf.mxu0
    %v1162 = vadd.f32 %v1079, %v1161
    %v1163 = vpop.f32.mrf.mxu0
    %1164 = vdwg.mxu0
    %s1165 = scalar_lea.vmem [#allocation6], 320
    %1166 = vst [vmem:[%s1165] sm:$0xff] %v1147
    %1167 = vst [vmem:[%s1165 + $0x8] sm:$0xff] %v1152
    %1168 = vst [vmem:[%s1165 + $0x10] sm:$0xff] %v1157
    %1169 = vst [vmem:[%s1165 + $0x18] sm:$0xff] %v1162
    %v1170 = vld [vmem:[#allocation3 + $0xb] sm:$0x1]
    %v1171 = vlaneseq
    %v1172 = vshrl.u32 %v1171, 7
    %v1173 = vsub.s32 0, %v1172
    %v1174 = vrot.slane %v1170, %v1173
    %v1175 = vmul.f32 %v53, %v1174
    %v1176 = vmul.f32 %v58, %v1174
    %v1177 = vmul.f32 %v63, %v1174
    %v1178 = vmul.f32 %v68, %v1174
    %1179 = vmatprep.subr.mxu0 0.0
    %1180 = vmatpush1.msra.mxu0 0.0
    %1181 = vmatprep.subr.mxu0 0.0
    %1182 = vmatpush1.msra.mxu0 0.0
    %1183 = vmatprep.subr.mxu0 0.0
    %1184 = vmatpush1.msra.mxu0 0.0
    %1185 = vmatprep.subr.mxu0 0.0
    %1186 = vmatpush1.msra.mxu0 0.0
    %1187 = vmatprep.subr.mxu0 0.0
    %1188 = vmatpush1.msra.mxu0 0.0
    %1189 = vmatprep.subr.mxu0 0.0
    %1190 = vmatpush1.msra.mxu0 0.0
    %1191 = vmatprep.subr.mxu0 0.0
    %1192 = vmatpush1.msra.mxu0 0.0
    %1193 = vmatprep.subr.mxu0 0.0
    %1194 = vmatpush1.msra.mxu0 0.0
    %1195 = vmatprep.subr.mxu0 0.0
    %1196 = vmatpush1.msra.mxu0 0.0
    %1197 = vmatprep.subr.mxu0 0.0
    %1198 = vmatpush1.msra.mxu0 0.0
    %1199 = vmatprep.subr.mxu0 0.0
    %1200 = vmatpush1.msra.mxu0 0.0
    %1201 = vmatprep.subr.mxu0 0.0
    %1202 = vmatpush1.msra.mxu0 0.0
    %1203 = vmatprep.subr.mxu0 0.0
    %1204 = vmatpush1.msra.mxu0 %v1162
    %1205 = vmatprep.subr.mxu0 0.0
    %1206 = vmatpush1.msra.mxu0 %v1157
    %1207 = vmatprep.subr.mxu0 0.0
    %1208 = vmatpush1.msra.mxu0 %v1152
    %1209 = vmatprep.subr.mxu0 0.0
    %1210 = vmatpush1.msra.mxu0 %v1147
    %1211 = vmatprep.subr.mxu0 0.0
    %1212 = vmatpush2.msra.mxu0 0.0
    %1213 = vmatprep.subr.mxu0 0.0
    %1214 = vmatpush2.msra.mxu0 0.0
    %1215 = vmatprep.subr.mxu0 0.0
    %1216 = vmatpush2.msra.mxu0 0.0
    %1217 = vmatprep.subr.mxu0 0.0
    %1218 = vmatpush2.msra.mxu0 0.0
    %1219 = vmatprep.subr.mxu0 0.0
    %1220 = vmatpush2.msra.mxu0 0.0
    %1221 = vmatprep.subr.mxu0 0.0
    %1222 = vmatpush2.msra.mxu0 0.0
    %1223 = vmatprep.subr.mxu0 0.0
    %1224 = vmatpush2.msra.mxu0 0.0
    %1225 = vmatprep.subr.mxu0 0.0
    %1226 = vmatpush2.msra.mxu0 0.0
    %1227 = vmatprep.subr.mxu0 0.0
    %1228 = vmatpush2.msra.mxu0 0.0
    %1229 = vmatprep.subr.mxu0 0.0
    %1230 = vmatpush2.msra.mxu0 0.0
    %1231 = vmatprep.subr.mxu0 0.0
    %1232 = vmatpush2.msra.mxu0 0.0
    %1233 = vmatprep.subr.mxu0 0.0
    %1234 = vmatpush2.msra.mxu0 0.0
    %1235 = vmatprep.subr.mxu0 0.0
    %1236 = vmatpush2.msra.mxu0 0.0
    %1237 = vmatprep.subr.mxu0 0.0
    %1238 = vmatpush2.msra.mxu0 0.0
    %1239 = vmatprep.subr.mxu0 0.0
    %1240 = vmatpush2.msra.mxu0 0.0
    %1241 = vmatprep.subr.mxu0 0.0
    %1242 = vmatpush2.msra.mxu0 0.0
    %1243 = vmatprep.mubr.f32.mxu0 0.0
    %1244 = vmatmul.mubr.f32.gmra.mxu0 %v80
    %v1245 = vpop.f32.mrf.mxu0
    %v1246 = vadd.f32 %v1175, %v1245
    %v1247 = vpop.f32.mrf.mxu0
    %1248 = vmatprep.mubr.f32.mxu0 0.0
    %1249 = vmatmul.mubr.f32.gmra.mxu0 %v83
    %v1250 = vpop.f32.mrf.mxu0
    %v1251 = vadd.f32 %v1176, %v1250
    %v1252 = vpop.f32.mrf.mxu0
    %1253 = vmatprep.mubr.f32.mxu0 0.0
    %1254 = vmatmul.mubr.f32.gmra.mxu0 %v86
    %v1255 = vpop.f32.mrf.mxu0
    %v1256 = vadd.f32 %v1177, %v1255
    %v1257 = vpop.f32.mrf.mxu0
    %1258 = vmatprep.mubr.f32.mxu0 0.0
    %1259 = vmatmul.mubr.f32.gmra.mxu0 %v89
    %v1260 = vpop.f32.mrf.mxu0
    %v1261 = vadd.f32 %v1178, %v1260
    %v1262 = vpop.f32.mrf.mxu0
    %1263 = vdwg.mxu0
    %s1264 = scalar_lea.vmem [#allocation6], 352
    %1265 = vst [vmem:[%s1264] sm:$0xff] %v1246
    %1266 = vst [vmem:[%s1264 + $0x8] sm:$0xff] %v1251
    %1267 = vst [vmem:[%s1264 + $0x10] sm:$0xff] %v1256
    %1268 = vst [vmem:[%s1264 + $0x18] sm:$0xff] %v1261
    %v1269 = vld [vmem:[#allocation3 + $0xc] sm:$0x1]
    %v1270 = vlaneseq
    %v1271 = vshrl.u32 %v1270, 7
    %v1272 = vsub.s32 0, %v1271
    %v1273 = vrot.slane %v1269, %v1272
    %v1274 = vmul.f32 %v53, %v1273
    %v1275 = vmul.f32 %v58, %v1273
    %v1276 = vmul.f32 %v63, %v1273
    %v1277 = vmul.f32 %v68, %v1273
    %1278 = vmatprep.subr.mxu0 0.0
    %1279 = vmatpush1.msra.mxu0 0.0
    %1280 = vmatprep.subr.mxu0 0.0
    %1281 = vmatpush1.msra.mxu0 0.0
    %1282 = vmatprep.subr.mxu0 0.0
    %1283 = vmatpush1.msra.mxu0 0.0
    %1284 = vmatprep.subr.mxu0 0.0
    %1285 = vmatpush1.msra.mxu0 0.0
    %1286 = vmatprep.subr.mxu0 0.0
    %1287 = vmatpush1.msra.mxu0 0.0
    %1288 = vmatprep.subr.mxu0 0.0
    %1289 = vmatpush1.msra.mxu0 0.0
    %1290 = vmatprep.subr.mxu0 0.0
    %1291 = vmatpush1.msra.mxu0 0.0
    %1292 = vmatprep.subr.mxu0 0.0
    %1293 = vmatpush1.msra.mxu0 0.0
    %1294 = vmatprep.subr.mxu0 0.0
    %1295 = vmatpush1.msra.mxu0 0.0
    %1296 = vmatprep.subr.mxu0 0.0
    %1297 = vmatpush1.msra.mxu0 0.0
    %1298 = vmatprep.subr.mxu0 0.0
    %1299 = vmatpush1.msra.mxu0 0.0
    %1300 = vmatprep.subr.mxu0 0.0
    %1301 = vmatpush1.msra.mxu0 0.0
    %1302 = vmatprep.subr.mxu0 0.0
    %1303 = vmatpush1.msra.mxu0 %v1261
    %1304 = vmatprep.subr.mxu0 0.0
    %1305 = vmatpush1.msra.mxu0 %v1256
    %1306 = vmatprep.subr.mxu0 0.0
    %1307 = vmatpush1.msra.mxu0 %v1251
    %1308 = vmatprep.subr.mxu0 0.0
    %1309 = vmatpush1.msra.mxu0 %v1246
    %1310 = vmatprep.subr.mxu0 0.0
    %1311 = vmatpush2.msra.mxu0 0.0
    %1312 = vmatprep.subr.mxu0 0.0
    %1313 = vmatpush2.msra.mxu0 0.0
    %1314 = vmatprep.subr.mxu0 0.0
    %1315 = vmatpush2.msra.mxu0 0.0
    %1316 = vmatprep.subr.mxu0 0.0
    %1317 = vmatpush2.msra.mxu0 0.0
    %1318 = vmatprep.subr.mxu0 0.0
    %1319 = vmatpush2.msra.mxu0 0.0
    %1320 = vmatprep.subr.mxu0 0.0
    %1321 = vmatpush2.msra.mxu0 0.0
    %1322 = vmatprep.subr.mxu0 0.0
    %1323 = vmatpush2.msra.mxu0 0.0
    %1324 = vmatprep.subr.mxu0 0.0
    %1325 = vmatpush2.msra.mxu0 0.0
    %1326 = vmatprep.subr.mxu0 0.0
    %1327 = vmatpush2.msra.mxu0 0.0
    %1328 = vmatprep.subr.mxu0 0.0
    %1329 = vmatpush2.msra.mxu0 0.0
    %1330 = vmatprep.subr.mxu0 0.0
    %1331 = vmatpush2.msra.mxu0 0.0
    %1332 = vmatprep.subr.mxu0 0.0
    %1333 = vmatpush2.msra.mxu0 0.0
    %1334 = vmatprep.subr.mxu0 0.0
    %1335 = vmatpush2.msra.mxu0 0.0
    %1336 = vmatprep.subr.mxu0 0.0
    %1337 = vmatpush2.msra.mxu0 0.0
    %1338 = vmatprep.subr.mxu0 0.0
    %1339 = vmatpush2.msra.mxu0 0.0
    %1340 = vmatprep.subr.mxu0 0.0
    %1341 = vmatpush2.msra.mxu0 0.0
    %1342 = vmatprep.mubr.f32.mxu0 0.0
    %1343 = vmatmul.mubr.f32.gmra.mxu0 %v80
    %v1344 = vpop.f32.mrf.mxu0
    %v1345 = vadd.f32 %v1274, %v1344
    %v1346 = vpop.f32.mrf.mxu0
    %1347 = vmatprep.mubr.f32.mxu0 0.0
    %1348 = vmatmul.mubr.f32.gmra.mxu0 %v83
    %v1349 = vpop.f32.mrf.mxu0
    %v1350 = vadd.f32 %v1275, %v1349
    %v1351 = vpop.f32.mrf.mxu0
    %1352 = vmatprep.mubr.f32.mxu0 0.0
    %1353 = vmatmul.mubr.f32.gmra.mxu0 %v86
    %v1354 = vpop.f32.mrf.mxu0
    %v1355 = vadd.f32 %v1276, %v1354
    %v1356 = vpop.f32.mrf.mxu0
    %1357 = vmatprep.mubr.f32.mxu0 0.0
    %1358 = vmatmul.mubr.f32.gmra.mxu0 %v89
    %v1359 = vpop.f32.mrf.mxu0
    %v1360 = vadd.f32 %v1277, %v1359
    %v1361 = vpop.f32.mrf.mxu0
    %1362 = vdwg.mxu0
    %s1363 = scalar_lea.vmem [#allocation6], 384
    %1364 = vst [vmem:[%s1363] sm:$0xff] %v1345
    %1365 = vst [vmem:[%s1363 + $0x8] sm:$0xff] %v1350
    %1366 = vst [vmem:[%s1363 + $0x10] sm:$0xff] %v1355
    %1367 = vst [vmem:[%s1363 + $0x18] sm:$0xff] %v1360
    %v1368 = vld [vmem:[#allocation3 + $0xd] sm:$0x1]
    %v1369 = vlaneseq
    %v1370 = vshrl.u32 %v1369, 7
    %v1371 = vsub.s32 0, %v1370
    %v1372 = vrot.slane %v1368, %v1371
    %v1373 = vmul.f32 %v53, %v1372
    %v1374 = vmul.f32 %v58, %v1372
    %v1375 = vmul.f32 %v63, %v1372
    %v1376 = vmul.f32 %v68, %v1372
    %1377 = vmatprep.subr.mxu0 0.0
    %1378 = vmatpush1.msra.mxu0 0.0
    %1379 = vmatprep.subr.mxu0 0.0
    %1380 = vmatpush1.msra.mxu0 0.0
    %1381 = vmatprep.subr.mxu0 0.0
    %1382 = vmatpush1.msra.mxu0 0.0
    %1383 = vmatprep.subr.mxu0 0.0
    %1384 = vmatpush1.msra.mxu0 0.0
    %1385 = vmatprep.subr.mxu0 0.0
    %1386 = vmatpush1.msra.mxu0 0.0
    %1387 = vmatprep.subr.mxu0 0.0
    %1388 = vmatpush1.msra.mxu0 0.0
    %1389 = vmatprep.subr.mxu0 0.0
    %1390 = vmatpush1.msra.mxu0 0.0
    %1391 = vmatprep.subr.mxu0 0.0
    %1392 = vmatpush1.msra.mxu0 0.0
    %1393 = vmatprep.subr.mxu0 0.0
    %1394 = vmatpush1.msra.mxu0 0.0
    %1395 = vmatprep.subr.mxu0 0.0
    %1396 = vmatpush1.msra.mxu0 0.0
    %1397 = vmatprep.subr.mxu0 0.0
    %1398 = vmatpush1.msra.mxu0 0.0
    %1399 = vmatprep.subr.mxu0 0.0
    %1400 = vmatpush1.msra.mxu0 0.0
    %1401 = vmatprep.subr.mxu0 0.0
    %1402 = vmatpush1.msra.mxu0 %v1360
    %1403 = vmatprep.subr.mxu0 0.0
    %1404 = vmatpush1.msra.mxu0 %v1355
    %1405 = vmatprep.subr.mxu0 0.0
    %1406 = vmatpush1.msra.mxu0 %v1350
    %1407 = vmatprep.subr.mxu0 0.0
    %1408 = vmatpush1.msra.mxu0 %v1345
    %1409 = vmatprep.subr.mxu0 0.0
    %1410 = vmatpush2.msra.mxu0 0.0
    %1411 = vmatprep.subr.mxu0 0.0
    %1412 = vmatpush2.msra.mxu0 0.0
    %1413 = vmatprep.subr.mxu0 0.0
    %1414 = vmatpush2.msra.mxu0 0.0
    %1415 = vmatprep.subr.mxu0 0.0
    %1416 = vmatpush2.msra.mxu0 0.0
    %1417 = vmatprep.subr.mxu0 0.0
    %1418 = vmatpush2.msra.mxu0 0.0
    %1419 = vmatprep.subr.mxu0 0.0
    %1420 = vmatpush2.msra.mxu0 0.0
    %1421 = vmatprep.subr.mxu0 0.0
    %1422 = vmatpush2.msra.mxu0 0.0
    %1423 = vmatprep.subr.mxu0 0.0
    %1424 = vmatpush2.msra.mxu0 0.0
    %1425 = vmatprep.subr.mxu0 0.0
    %1426 = vmatpush2.msra.mxu0 0.0
    %1427 = vmatprep.subr.mxu0 0.0
    %1428 = vmatpush2.msra.mxu0 0.0
    %1429 = vmatprep.subr.mxu0 0.0
    %1430 = vmatpush2.msra.mxu0 0.0
    %1431 = vmatprep.subr.mxu0 0.0
    %1432 = vmatpush2.msra.mxu0 0.0
    %1433 = vmatprep.subr.mxu0 0.0
    %1434 = vmatpush2.msra.mxu0 0.0
    %1435 = vmatprep.subr.mxu0 0.0
    %1436 = vmatpush2.msra.mxu0 0.0
    %1437 = vmatprep.subr.mxu0 0.0
    %1438 = vmatpush2.msra.mxu0 0.0
    %1439 = vmatprep.subr.mxu0 0.0
    %1440 = vmatpush2.msra.mxu0 0.0
    %1441 = vmatprep.mubr.f32.mxu0 0.0
    %1442 = vmatmul.mubr.f32.gmra.mxu0 %v80
    %v1443 = vpop.f32.mrf.mxu0
    %v1444 = vadd.f32 %v1373, %v1443
    %v1445 = vpop.f32.mrf.mxu0
    %1446 = vmatprep.mubr.f32.mxu0 0.0
    %1447 = vmatmul.mubr.f32.gmra.mxu0 %v83
    %v1448 = vpop.f32.mrf.mxu0
    %v1449 = vadd.f32 %v1374, %v1448
    %v1450 = vpop.f32.mrf.mxu0
    %1451 = vmatprep.mubr.f32.mxu0 0.0
    %1452 = vmatmul.mubr.f32.gmra.mxu0 %v86
    %v1453 = vpop.f32.mrf.mxu0
    %v1454 = vadd.f32 %v1375, %v1453
    %v1455 = vpop.f32.mrf.mxu0
    %1456 = vmatprep.mubr.f32.mxu0 0.0
    %1457 = vmatmul.mubr.f32.gmra.mxu0 %v89
    %v1458 = vpop.f32.mrf.mxu0
    %v1459 = vadd.f32 %v1376, %v1458
    %v1460 = vpop.f32.mrf.mxu0
    %1461 = vdwg.mxu0
    %s1462 = scalar_lea.vmem [#allocation6], 416
    %1463 = vst [vmem:[%s1462] sm:$0xff] %v1444
    %1464 = vst [vmem:[%s1462 + $0x8] sm:$0xff] %v1449
    %1465 = vst [vmem:[%s1462 + $0x10] sm:$0xff] %v1454
    %1466 = vst [vmem:[%s1462 + $0x18] sm:$0xff] %v1459
    %v1467 = vld [vmem:[#allocation3 + $0xe] sm:$0x1]
    %v1468 = vlaneseq
    %v1469 = vshrl.u32 %v1468, 7
    %v1470 = vsub.s32 0, %v1469
    %v1471 = vrot.slane %v1467, %v1470
    %v1472 = vmul.f32 %v53, %v1471
    %v1473 = vmul.f32 %v58, %v1471
    %v1474 = vmul.f32 %v63, %v1471
    %v1475 = vmul.f32 %v68, %v1471
    %1476 = vmatprep.subr.mxu0 0.0
    %1477 = vmatpush1.msra.mxu0 0.0
    %1478 = vmatprep.subr.mxu0 0.0
    %1479 = vmatpush1.msra.mxu0 0.0
    %1480 = vmatprep.subr.mxu0 0.0
    %1481 = vmatpush1.msra.mxu0 0.0
    %1482 = vmatprep.subr.mxu0 0.0
    %1483 = vmatpush1.msra.mxu0 0.0
    %1484 = vmatprep.subr.mxu0 0.0
    %1485 = vmatpush1.msra.mxu0 0.0
    %1486 = vmatprep.subr.mxu0 0.0
    %1487 = vmatpush1.msra.mxu0 0.0
    %1488 = vmatprep.subr.mxu0 0.0
    %1489 = vmatpush1.msra.mxu0 0.0
    %1490 = vmatprep.subr.mxu0 0.0
    %1491 = vmatpush1.msra.mxu0 0.0
    %1492 = vmatprep.subr.mxu0 0.0
    %1493 = vmatpush1.msra.mxu0 0.0
    %1494 = vmatprep.subr.mxu0 0.0
    %1495 = vmatpush1.msra.mxu0 0.0
    %1496 = vmatprep.subr.mxu0 0.0
    %1497 = vmatpush1.msra.mxu0 0.0
    %1498 = vmatprep.subr.mxu0 0.0
    %1499 = vmatpush1.msra.mxu0 0.0
    %1500 = vmatprep.subr.mxu0 0.0
    %1501 = vmatpush1.msra.mxu0 %v1459
    %1502 = vmatprep.subr.mxu0 0.0
    %1503 = vmatpush1.msra.mxu0 %v1454
    %1504 = vmatprep.subr.mxu0 0.0
    %1505 = vmatpush1.msra.mxu0 %v1449
    %1506 = vmatprep.subr.mxu0 0.0
    %1507 = vmatpush1.msra.mxu0 %v1444
    %1508 = vmatprep.subr.mxu0 0.0
    %1509 = vmatpush2.msra.mxu0 0.0
    %1510 = vmatprep.subr.mxu0 0.0
    %1511 = vmatpush2.msra.mxu0 0.0
    %1512 = vmatprep.subr.mxu0 0.0
    %1513 = vmatpush2.msra.mxu0 0.0
    %1514 = vmatprep.subr.mxu0 0.0
    %1515 = vmatpush2.msra.mxu0 0.0
    %1516 = vmatprep.subr.mxu0 0.0
    %1517 = vmatpush2.msra.mxu0 0.0
    %1518 = vmatprep.subr.mxu0 0.0
    %1519 = vmatpush2.msra.mxu0 0.0
    %1520 = vmatprep.subr.mxu0 0.0
    %1521 = vmatpush2.msra.mxu0 0.0
    %1522 = vmatprep.subr.mxu0 0.0
    %1523 = vmatpush2.msra.mxu0 0.0
    %1524 = vmatprep.subr.mxu0 0.0
    %1525 = vmatpush2.msra.mxu0 0.0
    %1526 = vmatprep.subr.mxu0 0.0
    %1527 = vmatpush2.msra.mxu0 0.0
    %1528 = vmatprep.subr.mxu0 0.0
    %1529 = vmatpush2.msra.mxu0 0.0
    %1530 = vmatprep.subr.mxu0 0.0
    %1531 = vmatpush2.msra.mxu0 0.0
    %1532 = vmatprep.subr.mxu0 0.0
    %1533 = vmatpush2.msra.mxu0 0.0
    %1534 = vmatprep.subr.mxu0 0.0
    %1535 = vmatpush2.msra.mxu0 0.0
    %1536 = vmatprep.subr.mxu0 0.0
    %1537 = vmatpush2.msra.mxu0 0.0
    %1538 = vmatprep.subr.mxu0 0.0
    %1539 = vmatpush2.msra.mxu0 0.0
    %1540 = vmatprep.mubr.f32.mxu0 0.0
    %1541 = vmatmul.mubr.f32.gmra.mxu0 %v80
    %v1542 = vpop.f32.mrf.mxu0
    %v1543 = vadd.f32 %v1472, %v1542
    %v1544 = vpop.f32.mrf.mxu0
    %1545 = vmatprep.mubr.f32.mxu0 0.0
    %1546 = vmatmul.mubr.f32.gmra.mxu0 %v83
    %v1547 = vpop.f32.mrf.mxu0
    %v1548 = vadd.f32 %v1473, %v1547
    %v1549 = vpop.f32.mrf.mxu0
    %1550 = vmatprep.mubr.f32.mxu0 0.0
    %1551 = vmatmul.mubr.f32.gmra.mxu0 %v86
    %v1552 = vpop.f32.mrf.mxu0
    %v1553 = vadd.f32 %v1474, %v1552
    %v1554 = vpop.f32.mrf.mxu0
    %1555 = vmatprep.mubr.f32.mxu0 0.0
    %1556 = vmatmul.mubr.f32.gmra.mxu0 %v89
    %v1557 = vpop.f32.mrf.mxu0
    %v1558 = vadd.f32 %v1475, %v1557
    %v1559 = vpop.f32.mrf.mxu0
    %1560 = vdwg.mxu0
    %s1561 = scalar_lea.vmem [#allocation6], 448
    %1562 = vst [vmem:[%s1561] sm:$0xff] %v1543
    %1563 = vst [vmem:[%s1561 + $0x8] sm:$0xff] %v1548
    %1564 = vst [vmem:[%s1561 + $0x10] sm:$0xff] %v1553
    %1565 = vst [vmem:[%s1561 + $0x18] sm:$0xff] %v1558
    %v1566 = vld [vmem:[#allocation3 + $0xf] sm:$0x1]
    %v1567 = vlaneseq
    %v1568 = vshrl.u32 %v1567, 7
    %v1569 = vsub.s32 0, %v1568
    %v1570 = vrot.slane %v1566, %v1569
    %v1571 = vmul.f32 %v53, %v1570
    %v1572 = vmul.f32 %v58, %v1570
    %v1573 = vmul.f32 %v63, %v1570
    %v1574 = vmul.f32 %v68, %v1570
    %1575 = vmatprep.subr.mxu0 0.0
    %1576 = vmatpush1.msra.mxu0 0.0
    %1577 = vmatprep.subr.mxu0 0.0
    %1578 = vmatpush1.msra.mxu0 0.0
    %1579 = vmatprep.subr.mxu0 0.0
    %1580 = vmatpush1.msra.mxu0 0.0
    %1581 = vmatprep.subr.mxu0 0.0
    %1582 = vmatpush1.msra.mxu0 0.0
    %1583 = vmatprep.subr.mxu0 0.0
    %1584 = vmatpush1.msra.mxu0 0.0
    %1585 = vmatprep.subr.mxu0 0.0
    %1586 = vmatpush1.msra.mxu0 0.0
    %1587 = vmatprep.subr.mxu0 0.0
    %1588 = vmatpush1.msra.mxu0 0.0
    %1589 = vmatprep.subr.mxu0 0.0
    %1590 = vmatpush1.msra.mxu0 0.0
    %1591 = vmatprep.subr.mxu0 0.0
    %1592 = vmatpush1.msra.mxu0 0.0
    %1593 = vmatprep.subr.mxu0 0.0
    %1594 = vmatpush1.msra.mxu0 0.0
    %1595 = vmatprep.subr.mxu0 0.0
    %1596 = vmatpush1.msra.mxu0 0.0
    %1597 = vmatprep.subr.mxu0 0.0
    %1598 = vmatpush1.msra.mxu0 0.0
    %1599 = vmatprep.subr.mxu0 0.0
    %1600 = vmatpush1.msra.mxu0 %v1558
    %1601 = vmatprep.subr.mxu0 0.0
    %1602 = vmatpush1.msra.mxu0 %v1553
    %1603 = vmatprep.subr.mxu0 0.0
    %1604 = vmatpush1.msra.mxu0 %v1548
    %1605 = vmatprep.subr.mxu0 0.0
    %1606 = vmatpush1.msra.mxu0 %v1543
    %1607 = vmatprep.subr.mxu0 0.0
    %1608 = vmatpush2.msra.mxu0 0.0
    %1609 = vmatprep.subr.mxu0 0.0
    %1610 = vmatpush2.msra.mxu0 0.0
    %1611 = vmatprep.subr.mxu0 0.0
    %1612 = vmatpush2.msra.mxu0 0.0
    %1613 = vmatprep.subr.mxu0 0.0
    %1614 = vmatpush2.msra.mxu0 0.0
    %1615 = vmatprep.subr.mxu0 0.0
    %1616 = vmatpush2.msra.mxu0 0.0
    %1617 = vmatprep.subr.mxu0 0.0
    %1618 = vmatpush2.msra.mxu0 0.0
    %1619 = vmatprep.subr.mxu0 0.0
    %1620 = vmatpush2.msra.mxu0 0.0
    %1621 = vmatprep.subr.mxu0 0.0
    %1622 = vmatpush2.msra.mxu0 0.0
    %1623 = vmatprep.subr.mxu0 0.0
    %1624 = vmatpush2.msra.mxu0 0.0
    %1625 = vmatprep.subr.mxu0 0.0
    %1626 = vmatpush2.msra.mxu0 0.0
    %1627 = vmatprep.subr.mxu0 0.0
    %1628 = vmatpush2.msra.mxu0 0.0
    %1629 = vmatprep.subr.mxu0 0.0
    %1630 = vmatpush2.msra.mxu0 0.0
    %1631 = vmatprep.subr.mxu0 0.0
    %1632 = vmatpush2.msra.mxu0 0.0
    %1633 = vmatprep.subr.mxu0 0.0
    %1634 = vmatpush2.msra.mxu0 0.0
    %1635 = vmatprep.subr.mxu0 0.0
    %1636 = vmatpush2.msra.mxu0 0.0
    %1637 = vmatprep.subr.mxu0 0.0
    %1638 = vmatpush2.msra.mxu0 0.0
    %1639 = vmatprep.mubr.f32.mxu0 0.0
    %1640 = vmatmul.mubr.f32.gmra.mxu0 %v80
    %v1641 = vpop.f32.mrf.mxu0
    %v1642 = vadd.f32 %v1571, %v1641
    %v1643 = vpop.f32.mrf.mxu0
    %1644 = vmatprep.mubr.f32.mxu0 0.0
    %1645 = vmatmul.mubr.f32.gmra.mxu0 %v83
    %v1646 = vpop.f32.mrf.mxu0
    %v1647 = vadd.f32 %v1572, %v1646
    %v1648 = vpop.f32.mrf.mxu0
    %1649 = vmatprep.mubr.f32.mxu0 0.0
    %1650 = vmatmul.mubr.f32.gmra.mxu0 %v86
    %v1651 = vpop.f32.mrf.mxu0
    %v1652 = vadd.f32 %v1573, %v1651
    %v1653 = vpop.f32.mrf.mxu0
    %1654 = vmatprep.mubr.f32.mxu0 0.0
    %1655 = vmatmul.mubr.f32.gmra.mxu0 %v89
    %v1656 = vpop.f32.mrf.mxu0
    %v1657 = vadd.f32 %v1574, %v1656
    %v1658 = vpop.f32.mrf.mxu0
    %1659 = vdwg.mxu0
    %s1660 = scalar_lea.vmem [#allocation6], 480
    %1661 = vst [vmem:[%s1660] sm:$0xff] %v1642
    %1662 = vst [vmem:[%s1660 + $0x8] sm:$0xff] %v1647
    %1663 = vst [vmem:[%s1660 + $0x10] sm:$0xff] %v1652
    %1664 = vst [vmem:[%s1660 + $0x18] sm:$0xff] %v1657
    %1665 = vst [vmem:[#allocation2] sm:$0xff] %v1642
    %1666 = vst [vmem:[#allocation2 + $0x8] sm:$0xff] %v1647
    %1667 = vst [vmem:[#allocation2 + $0x10] sm:$0xff] %v1652
    %1668 = vst [vmem:[#allocation2 + $0x18] sm:$0xff] %v1657
    // Predicated region
    $region22: #{tpu_custom_call.1} parent=1 // pred_check
      _
    $region23: #{tpu_custom_call.1} parent=1 // pred_check_branch
      %1670 = sbr.rel (0) target = $region25
    $region24: #{tpu_custom_call.1} parent=1 // pred_region
      %s1672 = ssub.s32 8192, 8192
      %1673 = vsyncadd [#allocation5], %s1672
      %s1674 = sshll.u32 [#allocation6], 4
      %s1675 = int_to_ptr.vmem [resolvable:$true] %s1674
      %1680 = dma.vmem_to_hbm [thread:$0]  %s1675, 8192, %s3, [#allocation5], 128, 128, 8
    $region25: #{tpu_custom_call.1} parent=1 // pred_fallthru
      _
    // Predicated region
    $region26: #{tpu_custom_call.1} parent=1 // pred_check
      _
    $region27: #{tpu_custom_call.1} parent=1 // pred_check_branch
      %1682 = sbr.rel (0) target = $region29
    $region28: #{tpu_custom_call.1} parent=1 // pred_region
      %1683 = dma.done [#allocation5], 8192
    $region29: #{tpu_custom_call.1} parent=1 // pred_fallthru
      _
    %1684 = vsyncpa [#allocation4], 1
    %1685 = vsyncpa [#allocation5], 1

</llo_original>
